<compile_context>
chip_gen: v7x
topology: tpu7x:2x2x1
jax: 0.10.0
libtpu: 0.0.40
codegen_flags: <defaults>
</compile_context>

<pallas_src>
import math

import jax
import jax.numpy as jnp
import numpy as np
from jax.experimental import pallas as pl
from jax.experimental.pallas import tpu as pltpu


def _round_up(v, m):
    return -(-v // m) * m


# --------------------------------------------------------------------------
# host-side constants (pure numpy, depend only on static shapes)
# --------------------------------------------------------------------------

def _tap_shifts_masks(n, h_img, w_img, container):
    """Flat-lane shift + 0/1 validity mask per 3x3 tap, batch-stacked layout:
    lane = sample*h_img*w_img + h*w_img + w (lanes >= n*h*w are padding)."""
    p_img = h_img * w_img
    valid = n * p_img
    pp = np.arange(valid)
    hh = (pp % p_img) // w_img
    ww = pp % w_img
    shifts = []
    masks = np.zeros((9, container), np.float32)
    t = 0
    for oh in (-1, 0, 1):
        for ow in (-1, 0, 1):
            shifts.append(oh * w_img + ow)
            ok = ((hh + oh >= 0) & (hh + oh < h_img) &
                  (ww + ow >= 0) & (ww + ow < w_img))
            masks[t, :valid] = ok.astype(np.float32)
            t += 1
    return shifts, masks


def _pool_matrix(n, h, w, container_out):
    """(n*h*w, container_out): column q averages its 2x2 window (0.25 entries,
    exact in bf16); pad columns stay zero."""
    p_img = h * w
    ho, wo = h // 2, w // 2
    q_img = ho * wo
    mat = np.zeros((n * p_img, container_out), np.float32)
    pp = np.arange(n * p_img)
    nn = pp // p_img
    hh = (pp % p_img) // w
    ww = pp % w
    mat[pp, nn * q_img + (hh // 2) * wo + (ww // 2)] = 0.25
    return mat


def _seg_matrices(n, seg_len, container):
    """Per-sample segment reduce (scaled 1/seg_len) and 0/1 broadcast-back."""
    red = np.zeros((container, n), np.float32)
    bcast = np.zeros((n, container), np.float32)
    for i in range(n):
        red[i * seg_len:(i + 1) * seg_len, i] = 1.0 / seg_len
        bcast[i, i * seg_len:(i + 1) * seg_len] = 1.0
    return red, bcast


# --------------------------------------------------------------------------
# fused kernel
# --------------------------------------------------------------------------

def _make_resblk_kernel(normalize, downsample, shifts1, shifts2):
    def _lrelu(v):
        return jnp.where(v >= 0, v, 0.2 * v)

    def _stack_taps(v, masks, shifts):
        # v: (C, L) f32, masks: (9, L) 0/1 f32  ->  (9*C, L) stacked tap slab.
        # Rolls that wrap / cross an image-row or sample boundary only land on
        # masked (zeroed) tap positions, so batch stacking needs no halo.
        L = v.shape[1]
        parts = []
        for t, s in enumerate(shifts):
            rolled = v if s == 0 else pltpu.roll(v, shift=(-s) % L, axis=1)
            parts.append(rolled if t == 4 else rolled * masks[t:t + 1, :])
        return jnp.concatenate(parts, axis=0)

    def _inorm_lrelu(v, gamma, beta, red, bcast):
        # Two-pass per-(sample, channel) InstanceNorm (eps=1e-5) + LeakyReLU.
        # Stats via tiny f32 segment matmuls; pad lanes/channels stay harmless.
        mean = jnp.dot(v, red, preferred_element_type=jnp.float32)          # (C, N)
        mean_l = jnp.dot(mean, bcast, preferred_element_type=jnp.float32)   # (C, L)
        d = v - mean_l
        var = jnp.dot(d * d, red, preferred_element_type=jnp.float32)       # (C, N)
        rs_l = jnp.dot(jax.lax.rsqrt(var + 1e-5), bcast,
                       preferred_element_type=jnp.float32)                  # (C, L)
        return _lrelu(d * rs_l * gamma + beta)

    def kernel(*refs):
        o_ref = refs[-1]
        it = iter(refs[:-1])
        x = next(it)[...].astype(jnp.float32)                 # (Cp, L)
        if normalize:
            g1 = next(it)[...]; be1 = next(it)[...]
            g2 = next(it)[...]; be2 = next(it)[...]
            red1 = next(it)[...]; bc1 = next(it)[...]
            red2 = next(it)[...]; bc2 = next(it)[...]
        w1s = next(it)[...]                                    # (Cp, 9*Cp)  bf16
        b1 = next(it)[...]                                     # (Cp, 1)     f32
        w2s = next(it)[...]                                    # (Co, 10*Cp) bf16, * 1/sqrt2
        b2 = next(it)[...]                                     # (Co, 1)     f32, * 1/sqrt2
        m1 = next(it)[...]                                     # (9, L)      f32
        m2 = next(it)[...]                                     # (9, L2)     f32
        pool = next(it)[...] if downsample else None           # (L, L2)     bf16

        # ---- residual stage 1: [norm1] -> lrelu -> conv1 (one stacked matmul)
        r = _inorm_lrelu(x, g1, be1, red1, bc1) if normalize else _lrelu(x)
        st1 = _stack_taps(r, m1, shifts1).astype(jnp.bfloat16)
        r = jnp.dot(w1s, st1, preferred_element_type=jnp.float32) + b1

        # ---- 2x2 average pooling of the residual and the shortcut source ----
        if downsample:
            r = jnp.dot(r.astype(jnp.bfloat16), pool,
                        preferred_element_type=jnp.float32)
            sc = jnp.dot(x.astype(jnp.bfloat16), pool,
                         preferred_element_type=jnp.float32)
        else:
            sc = x

        # ---- stage 2 + shortcut + /sqrt(2): one stacked matmul ---------------
        # shortcut is tap #10; w2s / b2 already carry the 1/sqrt(2) factor.
        r = _inorm_lrelu(r, g2, be2, red2, bc2) if normalize else _lrelu(r)
        st2 = jnp.concatenate([_stack_taps(r, m2, shifts2), sc],
                              axis=0).astype(jnp.bfloat16)
        out = jnp.dot(w2s, st2, preferred_element_type=jnp.float32) + b2
        o_ref[...] = out.astype(o_ref.dtype)                   # lane-dense store

    return kernel


# --------------------------------------------------------------------------
# wrapper
# --------------------------------------------------------------------------

def resblk_forward(x_nchw, params, *, normalize=False, downsample=False):
    """Matches ResBlk.forward: (shortcut(x) + residual(x)) / sqrt(2).

    Params use native PyTorch layouts:
      conv1_w (Ci,Ci,3,3), conv1_b (Ci,), conv2_w (Co,Ci,3,3), conv2_b (Co,),
      conv1x1_w (Co,Ci,1,1), norm{1,2}_{g,b} (Ci,).
    """
    N, Cin, H, W = x_nchw.shape
    Cout = params["conv2_w"].shape[0]
    learned_sc = Cin != Cout
    Ho, Wo = (H // 2, W // 2) if downsample else (H, W)
    P, Q = H * W, Ho * Wo
    L = N * P                                       # stage-1 lane width
    L2 = N * Q                                      # stage-2 valid lanes
    C2 = _round_up(L2, 128) if downsample else L    # lane-dense output container
    Cp = _round_up(Cin, 8)                          # aligned sublane concat
    inv_sqrt2 = 1.0 / math.sqrt(2.0)

    # ---- layout plumbing (outside the kernel) -------------------------------
    # batch stacked on the lane axis: lane = n*H*W + h*W + w, channels on sublanes
    x_flat = jnp.pad(x_nchw, ((0, 0), (0, Cp - Cin), (0, 0), (0, 0)))
    x_flat = x_flat.transpose(1, 0, 2, 3).reshape(Cp, L)

    # conv weights stacked per tap: column index = tap*Cp + ci
    w1s = params["conv1_w"].transpose(0, 2, 3, 1).reshape(Cin, 9, Cin)
    w1s = jnp.pad(w1s, ((0, Cp - Cin), (0, 0), (0, Cp - Cin))).reshape(Cp, 9 * Cp)
    w2s = params["conv2_w"].transpose(0, 2, 3, 1).reshape(Cout, 9, Cin)
    w2s = jnp.pad(w2s, ((0, 0), (0, 0), (0, Cp - Cin))).reshape(Cout, 9 * Cp)
    wsc = (params["conv1x1_w"].reshape(Cout, Cin) if learned_sc
           else jnp.eye(Cin, dtype=jnp.float32))
    wsc = jnp.pad(wsc, ((0, 0), (0, Cp - Cin)))
    w2sc = jnp.concatenate([w2s, wsc], axis=1) * inv_sqrt2   # fold shortcut + /sqrt2
    b1 = jnp.pad(params["conv1_b"], (0, Cp - Cin)).reshape(Cp, 1).astype(jnp.float32)
    b2 = (params["conv2_b"].reshape(Cout, 1) * inv_sqrt2).astype(jnp.float32)

    shifts1, m1 = _tap_shifts_masks(N, H, W, L)
    shifts2, m2 = _tap_shifts_masks(N, Ho, Wo, C2)

    inputs = [x_flat]
    if normalize:
        def _cpad(p):
            return jnp.pad(p, (0, Cp - Cin)).reshape(Cp, 1).astype(jnp.float32)
        red1, bc1 = _seg_matrices(N, P, L)
        red2, bc2 = _seg_matrices(N, Q, C2)
        inputs += [_cpad(params["norm1_g"]), _cpad(params["norm1_b"]),
                   _cpad(params["norm2_g"]), _cpad(params["norm2_b"]),
                   jnp.asarray(red1), jnp.asarray(bc1),
                   jnp.asarray(red2), jnp.asarray(bc2)]
    inputs += [w1s.astype(jnp.bfloat16), b1, w2sc.astype(jnp.bfloat16), b2,
               jnp.asarray(m1), jnp.asarray(m2)]
    if downsample:
        inputs.append(jnp.asarray(_pool_matrix(N, H, W, C2)).astype(jnp.bfloat16))

    kernel = _make_resblk_kernel(normalize, downsample, shifts1, shifts2)

    out = pl.pallas_call(
        kernel,
        out_shape=jax.ShapeDtypeStruct((Cout, C2), x_nchw.dtype),
    )(*inputs)

    # lane-dense (Cout, C2) slab -> NCHW; pad lanes dropped outside the kernel.
    return out[:, :L2].reshape(Cout, N, Ho, Wo).transpose(1, 0, 2, 3)


# --------------------------------------------------------------------------
# pure-JAX reference (mirrors the PyTorch module)
# --------------------------------------------------------------------------

def _resblk_reference(x, params, *, normalize, downsample):
    Cout = params["conv2_w"].shape[0]
    learned_sc = x.shape[1] != Cout

    def lrelu(v):
        return jnp.where(v >= 0, v, 0.2 * v)

    def inorm(v, g, b):
        m = jnp.mean(v, axis=(2, 3), keepdims=True)
        var = jnp.mean((v - m) ** 2, axis=(2, 3), keepdims=True)
        vn = (v - m) / jnp.sqrt(var + 1e-5)
        return vn * g.reshape(1, -1, 1, 1) + b.reshape(1, -1, 1, 1)

    def conv(v, w, b=None, pad=0):
        y = jax.lax.conv_general_dilated(
            v, w, window_strides=(1, 1), padding=[(pad, pad), (pad, pad)],
            dimension_numbers=("NCHW", "OIHW", "NCHW"))
        if b is not None:
            y = y + b.reshape(1, -1, 1, 1)
        return y

    def pool(v):
        n, c, h, w = v.shape
        return v.reshape(n, c, h // 2, 2, w // 2, 2).mean(axis=(3, 5))

    s = x
    if learned_sc:
        s = conv(s, params["conv1x1_w"])
    if downsample:
        s = pool(s)

    r = x
    if normalize:
        r = inorm(r, params["norm1_g"], params["norm1_b"])
    r = lrelu(r)
    r = conv(r, params["conv1_w"], params["conv1_b"], pad=1)
    if downsample:
        r = pool(r)
    if normalize:
        r = inorm(r, params["norm2_g"], params["norm2_b"])
    r = lrelu(r)
    r = conv(r, params["conv2_w"], params["conv2_b"], pad=1)

    return (s + r) / math.sqrt(2.0)


# --------------------------------------------------------------------------
# main
# --------------------------------------------------------------------------

if __name__ == "__main__":
    key = jax.random.PRNGKey(0)
    N, Cin, H, W = 2, 4, 16, 16
    Cout = 8  # dim_in != dim_out -> learned shortcut (1x1 conv)
    ks = jax.random.split(key, 10)

    x = jax.random.normal(ks[0], (N, Cin, H, W), jnp.float32)
    params = {
        "conv1_w": 0.1 * jax.random.normal(ks[1], (Cin, Cin, 3, 3), jnp.float32),
        "conv1_b": 0.1 * jax.random.normal(ks[2], (Cin,), jnp.float32),
        "conv2_w": 0.1 * jax.random.normal(ks[3], (Cout, Cin, 3, 3), jnp.float32),
        "conv2_b": 0.1 * jax.random.normal(ks[4], (Cout,), jnp.float32),
        "conv1x1_w": 0.1 * jax.random.normal(ks[5], (Cout, Cin, 1, 1), jnp.float32),
        "norm1_g": 1.0 + 0.1 * jax.random.normal(ks[6], (Cin,), jnp.float32),
        "norm1_b": 0.1 * jax.random.normal(ks[7], (Cin,), jnp.float32),
        "norm2_g": 1.0 + 0.1 * jax.random.normal(ks[8], (Cin,), jnp.float32),
        "norm2_b": 0.1 * jax.random.normal(ks[9], (Cin,), jnp.float32),
    }

    fwd = jax.jit(lambda xx, pp: resblk_forward(
        xx, pp, normalize=True, downsample=True))
    out = jax.block_until_ready(fwd(x, params))

    assert out.shape == (N, Cout, H // 2, W // 2), out.shape
    assert bool(jnp.all(jnp.isfinite(out)))

    # Tolerance accounts for bf16 MXU operands (f32 accumulation) through the
    # norm1 -> conv1 -> pool -> norm2 -> conv2 chain vs. the pure-f32 reference.
    ref = _resblk_reference(x, params, normalize=True, downsample=True)
    err = float(jnp.max(jnp.abs(out - ref)))
    assert err < 6e-2, f"max abs error vs reference: {err}"

    print("KERNEL_OK")
</pallas_src>

<mosaic_0001>
module attributes {stable_mosaic.version = 11 : i64} {
  func.func @kernel(%arg0: memref<8x512xf32, #tpu.memory_space<vmem>>, %arg1: memref<8x1xf32, #tpu.memory_space<vmem>>, %arg2: memref<8x1xf32, #tpu.memory_space<vmem>>, %arg3: memref<8x1xf32, #tpu.memory_space<vmem>>, %arg4: memref<8x1xf32, #tpu.memory_space<vmem>>, %arg5: memref<512x2xf32, #tpu.memory_space<vmem>>, %arg6: memref<2x512xf32, #tpu.memory_space<vmem>>, %arg7: memref<128x2xf32, #tpu.memory_space<vmem>>, %arg8: memref<2x128xf32, #tpu.memory_space<vmem>>, %arg9: memref<8x72xbf16, #tpu.memory_space<vmem>>, %arg10: memref<8x1xf32, #tpu.memory_space<vmem>>, %arg11: memref<8x80xbf16, #tpu.memory_space<vmem>>, %arg12: memref<8x1xf32, #tpu.memory_space<vmem>>, %arg13: memref<9x512xf32, #tpu.memory_space<vmem>>, %arg14: memref<9x128xf32, #tpu.memory_space<vmem>>, %arg15: memref<512x128xbf16, #tpu.memory_space<vmem>>, %arg16: memref<8x128xf32, #tpu.memory_space<vmem>>) attributes {dimension_semantics = [], scalar_prefetch = 0 : i64, scratch_operands = 0 : i64, tpu.core_type = #tpu.core_type<tc>} {
    %c0 = arith.constant 0 : index
    %c0_0 = arith.constant 0 : index
    %0 = vector.load %arg0[%c0, %c0_0] : memref<8x512xf32, #tpu.memory_space<vmem>>, vector<8x512xf32>
    %c0_1 = arith.constant 0 : index
    %c0_2 = arith.constant 0 : index
    %1 = vector.load %arg1[%c0_1, %c0_2] : memref<8x1xf32, #tpu.memory_space<vmem>>, vector<8x1xf32>
    %c0_3 = arith.constant 0 : index
    %c0_4 = arith.constant 0 : index
    %2 = vector.load %arg2[%c0_3, %c0_4] : memref<8x1xf32, #tpu.memory_space<vmem>>, vector<8x1xf32>
    %c0_5 = arith.constant 0 : index
    %c0_6 = arith.constant 0 : index
    %3 = vector.load %arg3[%c0_5, %c0_6] : memref<8x1xf32, #tpu.memory_space<vmem>>, vector<8x1xf32>
    %c0_7 = arith.constant 0 : index
    %c0_8 = arith.constant 0 : index
    %4 = vector.load %arg4[%c0_7, %c0_8] : memref<8x1xf32, #tpu.memory_space<vmem>>, vector<8x1xf32>
    %c0_9 = arith.constant 0 : index
    %c0_10 = arith.constant 0 : index
    %5 = vector.load %arg5[%c0_9, %c0_10] : memref<512x2xf32, #tpu.memory_space<vmem>>, vector<512x2xf32>
    %c0_11 = arith.constant 0 : index
    %c0_12 = arith.constant 0 : index
    %6 = vector.load %arg6[%c0_11, %c0_12] : memref<2x512xf32, #tpu.memory_space<vmem>>, vector<2x512xf32>
    %c0_13 = arith.constant 0 : index
    %c0_14 = arith.constant 0 : index
    %7 = vector.load %arg7[%c0_13, %c0_14] : memref<128x2xf32, #tpu.memory_space<vmem>>, vector<128x2xf32>
    %c0_15 = arith.constant 0 : index
    %c0_16 = arith.constant 0 : index
    %8 = vector.load %arg8[%c0_15, %c0_16] : memref<2x128xf32, #tpu.memory_space<vmem>>, vector<2x128xf32>
    %c0_17 = arith.constant 0 : index
    %c0_18 = arith.constant 0 : index
    %9 = vector.load %arg9[%c0_17, %c0_18] : memref<8x72xbf16, #tpu.memory_space<vmem>>, vector<8x72xbf16>
    %c0_19 = arith.constant 0 : index
    %c0_20 = arith.constant 0 : index
    %10 = vector.load %arg10[%c0_19, %c0_20] : memref<8x1xf32, #tpu.memory_space<vmem>>, vector<8x1xf32>
    %c0_21 = arith.constant 0 : index
    %c0_22 = arith.constant 0 : index
    %11 = vector.load %arg11[%c0_21, %c0_22] : memref<8x80xbf16, #tpu.memory_space<vmem>>, vector<8x80xbf16>
    %c0_23 = arith.constant 0 : index
    %c0_24 = arith.constant 0 : index
    %12 = vector.load %arg12[%c0_23, %c0_24] : memref<8x1xf32, #tpu.memory_space<vmem>>, vector<8x1xf32>
    %c0_25 = arith.constant 0 : index
    %c0_26 = arith.constant 0 : index
    %13 = vector.load %arg13[%c0_25, %c0_26] : memref<9x512xf32, #tpu.memory_space<vmem>>, vector<9x512xf32>
    %c0_27 = arith.constant 0 : index
    %c0_28 = arith.constant 0 : index
    %14 = vector.load %arg14[%c0_27, %c0_28] : memref<9x128xf32, #tpu.memory_space<vmem>>, vector<9x128xf32>
    %c0_29 = arith.constant 0 : index
    %c0_30 = arith.constant 0 : index
    %15 = vector.load %arg15[%c0_29, %c0_30] : memref<512x128xbf16, #tpu.memory_space<vmem>>, vector<512x128xbf16>
    %cst = arith.constant dense<0.000000e+00> : vector<8x2xf32>
    %16 = tpu.matmul %0, %5, %cst {dimension_numbers = #tpu.dot_dimension_numbers<[1], [0], [0], [1], [0, 0, 1, 1], [], []>} : vector<8x512xf32>, vector<512x2xf32>, vector<8x2xf32> -> vector<8x2xf32>
    %cst_31 = arith.constant dense<0.000000e+00> : vector<8x512xf32>
    %17 = tpu.matmul %16, %6, %cst_31 {dimension_numbers = #tpu.dot_dimension_numbers<[1], [0], [0], [1], [0, 0, 1, 1], [], []>} : vector<8x2xf32>, vector<2x512xf32>, vector<8x512xf32> -> vector<8x512xf32>
    %18 = arith.subf %0, %17 : vector<8x512xf32>
    %19 = arith.mulf %18, %18 : vector<8x512xf32>
    %cst_32 = arith.constant dense<0.000000e+00> : vector<8x2xf32>
    %20 = tpu.matmul %19, %5, %cst_32 {dimension_numbers = #tpu.dot_dimension_numbers<[1], [0], [0], [1], [0, 0, 1, 1], [], []>} : vector<8x512xf32>, vector<512x2xf32>, vector<8x2xf32> -> vector<8x2xf32>
    %cst_33 = arith.constant 9.99999974E-6 : f32
    %21 = vector.broadcast %cst_33 : f32 to vector<8x2xf32>
    %22 = arith.addf %20, %21 : vector<8x2xf32>
    %23 = math.rsqrt %22 : vector<8x2xf32>
    %cst_34 = arith.constant dense<0.000000e+00> : vector<8x512xf32>
    %24 = tpu.matmul %23, %6, %cst_34 {dimension_numbers = #tpu.dot_dimension_numbers<[1], [0], [0], [1], [0, 0, 1, 1], [], []>} : vector<8x2xf32>, vector<2x512xf32>, vector<8x512xf32> -> vector<8x512xf32>
    %25 = arith.mulf %18, %24 : vector<8x512xf32>
    %26 = vector.broadcast %1 : vector<8x1xf32> to vector<8x512xf32>
    %27 = arith.mulf %25, %26 : vector<8x512xf32>
    %28 = vector.broadcast %2 : vector<8x1xf32> to vector<8x512xf32>
    %29 = arith.addf %27, %28 : vector<8x512xf32>
    %cst_35 = arith.constant 0.000000e+00 : f32
    %30 = vector.broadcast %cst_35 : f32 to vector<8x512xf32>
    %31 = arith.cmpf oge, %29, %30 : vector<8x512xf32>
    %cst_36 = arith.constant 2.000000e-01 : f32
    %32 = vector.broadcast %cst_36 : f32 to vector<8x512xf32>
    %33 = arith.mulf %32, %29 : vector<8x512xf32>
    %34 = arith.select %31, %29, %33 : vector<8x512xi1>, vector<8x512xf32>
    %c17_i32 = arith.constant 17 : i32
    %35 = tpu.dynamic_rotate %34 by %c17_i32 dim 1 : vector<8x512xf32>, i32 -> vector<8x512xf32>
    %36 = vector.extract_strided_slice %13 {offsets = [0, 0], sizes = [1, 512], strides = [1, 1]} : vector<9x512xf32> to vector<1x512xf32>
    %37 = vector.broadcast %36 : vector<1x512xf32> to vector<8x512xf32>
    %38 = arith.mulf %35, %37 : vector<8x512xf32>
    %c16_i32 = arith.constant 16 : i32
    %39 = tpu.dynamic_rotate %34 by %c16_i32 dim 1 : vector<8x512xf32>, i32 -> vector<8x512xf32>
    %40 = vector.extract_strided_slice %13 {offsets = [1, 0], sizes = [1, 512], strides = [1, 1]} : vector<9x512xf32> to vector<1x512xf32>
    %41 = vector.broadcast %40 : vector<1x512xf32> to vector<8x512xf32>
    %42 = arith.mulf %39, %41 : vector<8x512xf32>
    %c15_i32 = arith.constant 15 : i32
    %43 = tpu.dynamic_rotate %34 by %c15_i32 dim 1 : vector<8x512xf32>, i32 -> vector<8x512xf32>
    %44 = vector.extract_strided_slice %13 {offsets = [2, 0], sizes = [1, 512], strides = [1, 1]} : vector<9x512xf32> to vector<1x512xf32>
    %45 = vector.broadcast %44 : vector<1x512xf32> to vector<8x512xf32>
    %46 = arith.mulf %43, %45 : vector<8x512xf32>
    %c1_i32 = arith.constant 1 : i32
    %47 = tpu.dynamic_rotate %34 by %c1_i32 dim 1 : vector<8x512xf32>, i32 -> vector<8x512xf32>
    %48 = vector.extract_strided_slice %13 {offsets = [3, 0], sizes = [1, 512], strides = [1, 1]} : vector<9x512xf32> to vector<1x512xf32>
    %49 = vector.broadcast %48 : vector<1x512xf32> to vector<8x512xf32>
    %50 = arith.mulf %47, %49 : vector<8x512xf32>
    %c511_i32 = arith.constant 511 : i32
    %51 = tpu.dynamic_rotate %34 by %c511_i32 dim 1 : vector<8x512xf32>, i32 -> vector<8x512xf32>
    %52 = vector.extract_strided_slice %13 {offsets = [5, 0], sizes = [1, 512], strides = [1, 1]} : vector<9x512xf32> to vector<1x512xf32>
    %53 = vector.broadcast %52 : vector<1x512xf32> to vector<8x512xf32>
    %54 = arith.mulf %51, %53 : vector<8x512xf32>
    %c497_i32 = arith.constant 497 : i32
    %55 = tpu.dynamic_rotate %34 by %c497_i32 dim 1 : vector<8x512xf32>, i32 -> vector<8x512xf32>
    %56 = vector.extract_strided_slice %13 {offsets = [6, 0], sizes = [1, 512], strides = [1, 1]} : vector<9x512xf32> to vector<1x512xf32>
    %57 = vector.broadcast %56 : vector<1x512xf32> to vector<8x512xf32>
    %58 = arith.mulf %55, %57 : vector<8x512xf32>
    %c496_i32 = arith.constant 496 : i32
    %59 = tpu.dynamic_rotate %34 by %c496_i32 dim 1 : vector<8x512xf32>, i32 -> vector<8x512xf32>
    %60 = vector.extract_strided_slice %13 {offsets = [7, 0], sizes = [1, 512], strides = [1, 1]} : vector<9x512xf32> to vector<1x512xf32>
    %61 = vector.broadcast %60 : vector<1x512xf32> to vector<8x512xf32>
    %62 = arith.mulf %59, %61 : vector<8x512xf32>
    %c495_i32 = arith.constant 495 : i32
    %63 = tpu.dynamic_rotate %34 by %c495_i32 dim 1 : vector<8x512xf32>, i32 -> vector<8x512xf32>
    %64 = vector.extract_strided_slice %13 {offsets = [8, 0], sizes = [1, 512], strides = [1, 1]} : vector<9x512xf32> to vector<1x512xf32>
    %65 = vector.broadcast %64 : vector<1x512xf32> to vector<8x512xf32>
    %66 = arith.mulf %63, %65 : vector<8x512xf32>
    %67 = tpu.concatenate %38, %42, %46, %50, %34, %54, %58, %62, %66 in 0 : vector<8x512xf32>, vector<8x512xf32>, vector<8x512xf32>, vector<8x512xf32>, vector<8x512xf32>, vector<8x512xf32>, vector<8x512xf32>, vector<8x512xf32>, vector<8x512xf32> -> vector<72x512xf32>
    %68 = arith.truncf %67 : vector<72x512xf32> to vector<72x512xbf16>
    %cst_37 = arith.constant dense<0.000000e+00> : vector<8x512xf32>
    %69 = tpu.matmul %9, %68, %cst_37 {dimension_numbers = #tpu.dot_dimension_numbers<[1], [0], [0], [1], [0, 0, 1, 1], [], []>} : vector<8x72xbf16>, vector<72x512xbf16>, vector<8x512xf32> -> vector<8x512xf32>
    %70 = vector.broadcast %10 : vector<8x1xf32> to vector<8x512xf32>
    %71 = arith.addf %69, %70 : vector<8x512xf32>
    %72 = arith.truncf %71 : vector<8x512xf32> to vector<8x512xbf16>
    %cst_38 = arith.constant dense<0.000000e+00> : vector<8x128xf32>
    %73 = tpu.matmul %72, %15, %cst_38 {dimension_numbers = #tpu.dot_dimension_numbers<[1], [0], [0], [1], [0, 0, 1, 1], [], []>} : vector<8x512xbf16>, vector<512x128xbf16>, vector<8x128xf32> -> vector<8x128xf32>
    %74 = arith.truncf %0 : vector<8x512xf32> to vector<8x512xbf16>
    %cst_39 = arith.constant dense<0.000000e+00> : vector<8x128xf32>
    %75 = tpu.matmul %74, %15, %cst_39 {dimension_numbers = #tpu.dot_dimension_numbers<[1], [0], [0], [1], [0, 0, 1, 1], [], []>} : vector<8x512xbf16>, vector<512x128xbf16>, vector<8x128xf32> -> vector<8x128xf32>
    %cst_40 = arith.constant dense<0.000000e+00> : vector<8x2xf32>
    %76 = tpu.matmul %73, %7, %cst_40 {dimension_numbers = #tpu.dot_dimension_numbers<[1], [0], [0], [1], [0, 0, 1, 1], [], []>} : vector<8x128xf32>, vector<128x2xf32>, vector<8x2xf32> -> vector<8x2xf32>
    %cst_41 = arith.constant dense<0.000000e+00> : vector<8x128xf32>
    %77 = tpu.matmul %76, %8, %cst_41 {dimension_numbers = #tpu.dot_dimension_numbers<[1], [0], [0], [1], [0, 0, 1, 1], [], []>} : vector<8x2xf32>, vector<2x128xf32>, vector<8x128xf32> -> vector<8x128xf32>
    %78 = arith.subf %73, %77 : vector<8x128xf32>
    %79 = arith.mulf %78, %78 : vector<8x128xf32>
    %cst_42 = arith.constant dense<0.000000e+00> : vector<8x2xf32>
    %80 = tpu.matmul %79, %7, %cst_42 {dimension_numbers = #tpu.dot_dimension_numbers<[1], [0], [0], [1], [0, 0, 1, 1], [], []>} : vector<8x128xf32>, vector<128x2xf32>, vector<8x2xf32> -> vector<8x2xf32>
    %cst_43 = arith.constant 9.99999974E-6 : f32
    %81 = vector.broadcast %cst_43 : f32 to vector<8x2xf32>
    %82 = arith.addf %80, %81 : vector<8x2xf32>
    %83 = math.rsqrt %82 : vector<8x2xf32>
    %cst_44 = arith.constant dense<0.000000e+00> : vector<8x128xf32>
    %84 = tpu.matmul %83, %8, %cst_44 {dimension_numbers = #tpu.dot_dimension_numbers<[1], [0], [0], [1], [0, 0, 1, 1], [], []>} : vector<8x2xf32>, vector<2x128xf32>, vector<8x128xf32> -> vector<8x128xf32>
    %85 = arith.mulf %78, %84 : vector<8x128xf32>
    %86 = vector.broadcast %3 : vector<8x1xf32> to vector<8x128xf32>
    %87 = arith.mulf %85, %86 : vector<8x128xf32>
    %88 = vector.broadcast %4 : vector<8x1xf32> to vector<8x128xf32>
    %89 = arith.addf %87, %88 : vector<8x128xf32>
    %cst_45 = arith.constant 0.000000e+00 : f32
    %90 = vector.broadcast %cst_45 : f32 to vector<8x128xf32>
    %91 = arith.cmpf oge, %89, %90 : vector<8x128xf32>
    %cst_46 = arith.constant 2.000000e-01 : f32
    %92 = vector.broadcast %cst_46 : f32 to vector<8x128xf32>
    %93 = arith.mulf %92, %89 : vector<8x128xf32>
    %94 = arith.select %91, %89, %93 : vector<8x128xi1>, vector<8x128xf32>
    %c9_i32 = arith.constant 9 : i32
    %95 = tpu.dynamic_rotate %94 by %c9_i32 dim 1 : vector<8x128xf32>, i32 -> vector<8x128xf32>
    %96 = vector.extract_strided_slice %14 {offsets = [0, 0], sizes = [1, 128], strides = [1, 1]} : vector<9x128xf32> to vector<1x128xf32>
    %97 = vector.broadcast %96 : vector<1x128xf32> to vector<8x128xf32>
    %98 = arith.mulf %95, %97 : vector<8x128xf32>
    %c8_i32 = arith.constant 8 : i32
    %99 = tpu.dynamic_rotate %94 by %c8_i32 dim 1 : vector<8x128xf32>, i32 -> vector<8x128xf32>
    %100 = vector.extract_strided_slice %14 {offsets = [1, 0], sizes = [1, 128], strides = [1, 1]} : vector<9x128xf32> to vector<1x128xf32>
    %101 = vector.broadcast %100 : vector<1x128xf32> to vector<8x128xf32>
    %102 = arith.mulf %99, %101 : vector<8x128xf32>
    %c7_i32 = arith.constant 7 : i32
    %103 = tpu.dynamic_rotate %94 by %c7_i32 dim 1 : vector<8x128xf32>, i32 -> vector<8x128xf32>
    %104 = vector.extract_strided_slice %14 {offsets = [2, 0], sizes = [1, 128], strides = [1, 1]} : vector<9x128xf32> to vector<1x128xf32>
    %105 = vector.broadcast %104 : vector<1x128xf32> to vector<8x128xf32>
    %106 = arith.mulf %103, %105 : vector<8x128xf32>
    %c1_i32_47 = arith.constant 1 : i32
    %107 = tpu.dynamic_rotate %94 by %c1_i32_47 dim 1 : vector<8x128xf32>, i32 -> vector<8x128xf32>
    %108 = vector.extract_strided_slice %14 {offsets = [3, 0], sizes = [1, 128], strides = [1, 1]} : vector<9x128xf32> to vector<1x128xf32>
    %109 = vector.broadcast %108 : vector<1x128xf32> to vector<8x128xf32>
    %110 = arith.mulf %107, %109 : vector<8x128xf32>
    %c127_i32 = arith.constant 127 : i32
    %111 = tpu.dynamic_rotate %94 by %c127_i32 dim 1 : vector<8x128xf32>, i32 -> vector<8x128xf32>
    %112 = vector.extract_strided_slice %14 {offsets = [5, 0], sizes = [1, 128], strides = [1, 1]} : vector<9x128xf32> to vector<1x128xf32>
    %113 = vector.broadcast %112 : vector<1x128xf32> to vector<8x128xf32>
    %114 = arith.mulf %111, %113 : vector<8x128xf32>
    %c121_i32 = arith.constant 121 : i32
    %115 = tpu.dynamic_rotate %94 by %c121_i32 dim 1 : vector<8x128xf32>, i32 -> vector<8x128xf32>
    %116 = vector.extract_strided_slice %14 {offsets = [6, 0], sizes = [1, 128], strides = [1, 1]} : vector<9x128xf32> to vector<1x128xf32>
    %117 = vector.broadcast %116 : vector<1x128xf32> to vector<8x128xf32>
    %118 = arith.mulf %115, %117 : vector<8x128xf32>
    %c120_i32 = arith.constant 120 : i32
    %119 = tpu.dynamic_rotate %94 by %c120_i32 dim 1 : vector<8x128xf32>, i32 -> vector<8x128xf32>
    %120 = vector.extract_strided_slice %14 {offsets = [7, 0], sizes = [1, 128], strides = [1, 1]} : vector<9x128xf32> to vector<1x128xf32>
    %121 = vector.broadcast %120 : vector<1x128xf32> to vector<8x128xf32>
    %122 = arith.mulf %119, %121 : vector<8x128xf32>
    %c119_i32 = arith.constant 119 : i32
    %123 = tpu.dynamic_rotate %94 by %c119_i32 dim 1 : vector<8x128xf32>, i32 -> vector<8x128xf32>
    %124 = vector.extract_strided_slice %14 {offsets = [8, 0], sizes = [1, 128], strides = [1, 1]} : vector<9x128xf32> to vector<1x128xf32>
    %125 = vector.broadcast %124 : vector<1x128xf32> to vector<8x128xf32>
    %126 = arith.mulf %123, %125 : vector<8x128xf32>
    %127 = tpu.concatenate %98, %102, %106, %110, %94, %114, %118, %122, %126 in 0 : vector<8x128xf32>, vector<8x128xf32>, vector<8x128xf32>, vector<8x128xf32>, vector<8x128xf32>, vector<8x128xf32>, vector<8x128xf32>, vector<8x128xf32>, vector<8x128xf32> -> vector<72x128xf32>
    %128 = tpu.concatenate %127, %75 in 0 : vector<72x128xf32>, vector<8x128xf32> -> vector<80x128xf32>
    %129 = arith.truncf %128 : vector<80x128xf32> to vector<80x128xbf16>
    %cst_48 = arith.constant dense<0.000000e+00> : vector<8x128xf32>
    %130 = tpu.matmul %11, %129, %cst_48 {dimension_numbers = #tpu.dot_dimension_numbers<[1], [0], [0], [1], [0, 0, 1, 1], [], []>} : vector<8x80xbf16>, vector<80x128xbf16>, vector<8x128xf32> -> vector<8x128xf32>
    %131 = vector.broadcast %12 : vector<8x1xf32> to vector<8x128xf32>
    %132 = arith.addf %130, %131 : vector<8x128xf32>
    %c0_49 = arith.constant 0 : index
    %c0_50 = arith.constant 0 : index
    %133 = vector.load %arg16[%c0_49, %c0_50] : memref<8x128xf32, #tpu.memory_space<vmem>>, vector<8x128xf32>
    tpu.vector_store %arg16[%c0_49, %c0_50], %132 {strides = array<i32>} : memref<8x128xf32, #tpu.memory_space<vmem>>, vector<8x128xf32>,
    return
  }
}

</mosaic_0001>

<llo_original>
// kernel: _lambda_.1
$region0: #{_lambda_.1}
  #allocation0 [shape = 'u32[]', space=smem, size = 0x4, offset = 0x4, fixed_abs, tag = 'smem constant byte address 0x4 - core index']
  #allocation1 [shape = 'u32[144,128]{1,0:T(1,128)}', space=vmem, size = 0x12000, scoped, tag = 'internal scratch']
  %s0 = inlined_call_operand.vmem [shape: f32[8,512], index: 0, kind: input, shape index: {}]
  %s1 = inlined_call_operand.vmem [shape: f32[8,1], index: 1, kind: input, shape index: {}]
  %s2 = inlined_call_operand.vmem [shape: f32[8,1], index: 2, kind: input, shape index: {}]
  %s3 = inlined_call_operand.vmem [shape: f32[8,1], index: 3, kind: input, shape index: {}]
  %s4 = inlined_call_operand.vmem [shape: f32[8,1], index: 4, kind: input, shape index: {}]
  %s5 = inlined_call_operand.vmem [shape: f32[512,2], index: 5, kind: input, shape index: {}]
  %s6 = inlined_call_operand.vmem [shape: f32[2,512], index: 6, kind: input, shape index: {}]
  %s7 = inlined_call_operand.vmem [shape: f32[128,2], index: 7, kind: input, shape index: {}]
  %s8 = inlined_call_operand.vmem [shape: f32[2,128], index: 8, kind: input, shape index: {}]
  %s9 = inlined_call_operand.vmem [shape: bf16[8,72], index: 9, kind: input, shape index: {}]
  %s10 = inlined_call_operand.vmem [shape: f32[8,1], index: 10, kind: input, shape index: {}]
  %s11 = inlined_call_operand.vmem [shape: bf16[8,80], index: 11, kind: input, shape index: {}]
  %s12 = inlined_call_operand.vmem [shape: f32[8,1], index: 12, kind: input, shape index: {}]
  %s13 = inlined_call_operand.vmem [shape: f32[9,512], index: 13, kind: input, shape index: {}]
  %s14 = inlined_call_operand.vmem [shape: f32[9,128], index: 14, kind: input, shape index: {}]
  %s15 = inlined_call_operand.vmem [shape: bf16[512,128], index: 15, kind: input, shape index: {}]
  %s16 = inlined_call_operand.vmem [shape: f32[8,128], index: 16, kind: output, shape index: {}]
  %s17 = sld [smem:[#allocation0]]
  $region74: #{_lambda_.1} parent=0
    _
  %s19 = ssub.s32 1, %s17
  %s20 = scalar_select 0, %s19, %s17
  // Predicated region
  $region2: #{_lambda_.1} parent=0 // pred_check
    _
  $region3: #{_lambda_.1} parent=0 // pred_check_branch
    %22 = sbr.rel (0) target = $region5
  $region4: #{_lambda_.1} parent=0 // pred_region
    _
  $region5: #{_lambda_.1} parent=0 // pred_fallthru
    _
  // Predicated region
  $region6: #{_lambda_.1} parent=0 // pred_check
    _
  $region7: #{_lambda_.1} parent=0 // pred_check_branch
    %24 = sbr.rel (0) target = $region9
  $region8: #{_lambda_.1} parent=0 // pred_region
    _
  $region9: #{_lambda_.1} parent=0 // pred_fallthru
    _
  // Predicated region
  $region10: #{_lambda_.1} parent=0 // pred_check
    _
  $region11: #{_lambda_.1} parent=0 // pred_check_branch
    %26 = sbr.rel (0) target = $region13
  $region12: #{_lambda_.1} parent=0 // pred_region
    _
  $region13: #{_lambda_.1} parent=0 // pred_fallthru
    _
  // Predicated region
  $region14: #{_lambda_.1} parent=0 // pred_check
    _
  $region15: #{_lambda_.1} parent=0 // pred_check_branch
    %28 = sbr.rel (0) target = $region17
  $region16: #{_lambda_.1} parent=0 // pred_region
    _
  $region17: #{_lambda_.1} parent=0 // pred_fallthru
    _
  // Predicated region
  $region18: #{_lambda_.1} parent=0 // pred_check
    _
  $region19: #{_lambda_.1} parent=0 // pred_check_branch
    %30 = sbr.rel (0) target = $region21
  $region20: #{_lambda_.1} parent=0 // pred_region
    _
  $region21: #{_lambda_.1} parent=0 // pred_fallthru
    _
  // Predicated region
  $region22: #{_lambda_.1} parent=0 // pred_check
    _
  $region23: #{_lambda_.1} parent=0 // pred_check_branch
    %32 = sbr.rel (0) target = $region25
  $region24: #{_lambda_.1} parent=0 // pred_region
    _
  $region25: #{_lambda_.1} parent=0 // pred_fallthru
    _
  // Predicated region
  $region26: #{_lambda_.1} parent=0 // pred_check
    _
  $region27: #{_lambda_.1} parent=0 // pred_check_branch
    %34 = sbr.rel (0) target = $region29
  $region28: #{_lambda_.1} parent=0 // pred_region
    _
  $region29: #{_lambda_.1} parent=0 // pred_fallthru
    _
  // Predicated region
  $region30: #{_lambda_.1} parent=0 // pred_check
    _
  $region31: #{_lambda_.1} parent=0 // pred_check_branch
    %36 = sbr.rel (0) target = $region33
  $region32: #{_lambda_.1} parent=0 // pred_region
    _
  $region33: #{_lambda_.1} parent=0 // pred_fallthru
    _
  // Predicated region
  $region34: #{_lambda_.1} parent=0 // pred_check
    _
  $region35: #{_lambda_.1} parent=0 // pred_check_branch
    %38 = sbr.rel (0) target = $region37
  $region36: #{_lambda_.1} parent=0 // pred_region
    _
  $region37: #{_lambda_.1} parent=0 // pred_fallthru
    _
  // Predicated region
  $region38: #{_lambda_.1} parent=0 // pred_check
    _
  $region39: #{_lambda_.1} parent=0 // pred_check_branch
    %40 = sbr.rel (0) target = $region41
  $region40: #{_lambda_.1} parent=0 // pred_region
    _
  $region41: #{_lambda_.1} parent=0 // pred_fallthru
    _
  // Predicated region
  $region42: #{_lambda_.1} parent=0 // pred_check
    _
  $region43: #{_lambda_.1} parent=0 // pred_check_branch
    %42 = sbr.rel (0) target = $region45
  $region44: #{_lambda_.1} parent=0 // pred_region
    _
  $region45: #{_lambda_.1} parent=0 // pred_fallthru
    _
  // Predicated region
  $region46: #{_lambda_.1} parent=0 // pred_check
    _
  $region47: #{_lambda_.1} parent=0 // pred_check_branch
    %44 = sbr.rel (0) target = $region49
  $region48: #{_lambda_.1} parent=0 // pred_region
    _
  $region49: #{_lambda_.1} parent=0 // pred_fallthru
    _
  // Predicated region
  $region50: #{_lambda_.1} parent=0 // pred_check
    _
  $region51: #{_lambda_.1} parent=0 // pred_check_branch
    %46 = sbr.rel (0) target = $region53
  $region52: #{_lambda_.1} parent=0 // pred_region
    _
  $region53: #{_lambda_.1} parent=0 // pred_fallthru
    _
  // Predicated region
  $region54: #{_lambda_.1} parent=0 // pred_check
    _
  $region55: #{_lambda_.1} parent=0 // pred_check_branch
    %48 = sbr.rel (0) target = $region57
  $region56: #{_lambda_.1} parent=0 // pred_region
    _
  $region57: #{_lambda_.1} parent=0 // pred_fallthru
    _
  // Predicated region
  $region58: #{_lambda_.1} parent=0 // pred_check
    _
  $region59: #{_lambda_.1} parent=0 // pred_check_branch
    %50 = sbr.rel (0) target = $region61
  $region60: #{_lambda_.1} parent=0 // pred_region
    _
  $region61: #{_lambda_.1} parent=0 // pred_fallthru
    _
  // Predicated region
  $region62: #{_lambda_.1} parent=0 // pred_check
    _
  $region63: #{_lambda_.1} parent=0 // pred_check_branch
    %52 = sbr.rel (0) target = $region65
  $region64: #{_lambda_.1} parent=0 // pred_region
    _
  $region65: #{_lambda_.1} parent=0 // pred_fallthru
    _
  %v54 = vld [vmem:[%s0] sm:$0xff]
  %v55 = vld [vmem:[%s0 + $0x8] sm:$0xff]
  %v56 = vld [vmem:[%s0 + $0x10] sm:$0xff]
  %v57 = vld [vmem:[%s0 + $0x18] sm:$0xff]
  %v58 = vld [vmem:[%s1] sm:$0xff]
  %v59 = vld [vmem:[%s2] sm:$0xff]
  %v60 = vld [vmem:[%s3] sm:$0xff]
  %v61 = vld [vmem:[%s4] sm:$0xff]
  %v62 = vld [vmem:[%s5] sm:$0xff]
  %v63 = vld [vmem:[%s5 + $0x8] sm:$0xff]
  %v64 = vld [vmem:[%s5 + $0x10] sm:$0xff]
  %v65 = vld [vmem:[%s5 + $0x18] sm:$0xff]
  %v66 = vld [vmem:[%s5 + $0x20] sm:$0xff]
  %v67 = vld [vmem:[%s5 + $0x28] sm:$0xff]
  %v68 = vld [vmem:[%s5 + $0x30] sm:$0xff]
  %v69 = vld [vmem:[%s5 + $0x38] sm:$0xff]
  %v70 = vld [vmem:[%s5 + $0x40] sm:$0xff]
  %v71 = vld [vmem:[%s5 + $0x48] sm:$0xff]
  %v72 = vld [vmem:[%s5 + $0x50] sm:$0xff]
  %v73 = vld [vmem:[%s5 + $0x58] sm:$0xff]
  %v74 = vld [vmem:[%s5 + $0x60] sm:$0xff]
  %v75 = vld [vmem:[%s5 + $0x68] sm:$0xff]
  %v76 = vld [vmem:[%s5 + $0x70] sm:$0xff]
  %v77 = vld [vmem:[%s5 + $0x78] sm:$0xff]
  %v78 = vld [vmem:[%s5 + $0x80] sm:$0xff]
  %v79 = vld [vmem:[%s5 + $0x88] sm:$0xff]
  %v80 = vld [vmem:[%s5 + $0x90] sm:$0xff]
  %v81 = vld [vmem:[%s5 + $0x98] sm:$0xff]
  %v82 = vld [vmem:[%s5 + $0xa0] sm:$0xff]
  %v83 = vld [vmem:[%s5 + $0xa8] sm:$0xff]
  %v84 = vld [vmem:[%s5 + $0xb0] sm:$0xff]
  %v85 = vld [vmem:[%s5 + $0xb8] sm:$0xff]
  %v86 = vld [vmem:[%s5 + $0xc0] sm:$0xff]
  %v87 = vld [vmem:[%s5 + $0xc8] sm:$0xff]
  %v88 = vld [vmem:[%s5 + $0xd0] sm:$0xff]
  %v89 = vld [vmem:[%s5 + $0xd8] sm:$0xff]
  %v90 = vld [vmem:[%s5 + $0xe0] sm:$0xff]
  %v91 = vld [vmem:[%s5 + $0xe8] sm:$0xff]
  %v92 = vld [vmem:[%s5 + $0xf0] sm:$0xff]
  %v93 = vld [vmem:[%s5 + $0xf8] sm:$0xff]
  %v94 = vld [vmem:[%s5 + $0x100] sm:$0xff]
  %v95 = vld [vmem:[%s5 + $0x108] sm:$0xff]
  %v96 = vld [vmem:[%s5 + $0x110] sm:$0xff]
  %v97 = vld [vmem:[%s5 + $0x118] sm:$0xff]
  %v98 = vld [vmem:[%s5 + $0x120] sm:$0xff]
  %v99 = vld [vmem:[%s5 + $0x128] sm:$0xff]
  %v100 = vld [vmem:[%s5 + $0x130] sm:$0xff]
  %v101 = vld [vmem:[%s5 + $0x138] sm:$0xff]
  %v102 = vld [vmem:[%s5 + $0x140] sm:$0xff]
  %v103 = vld [vmem:[%s5 + $0x148] sm:$0xff]
  %v104 = vld [vmem:[%s5 + $0x150] sm:$0xff]
  %v105 = vld [vmem:[%s5 + $0x158] sm:$0xff]
  %v106 = vld [vmem:[%s5 + $0x160] sm:$0xff]
  %v107 = vld [vmem:[%s5 + $0x168] sm:$0xff]
  %v108 = vld [vmem:[%s5 + $0x170] sm:$0xff]
  %v109 = vld [vmem:[%s5 + $0x178] sm:$0xff]
  %v110 = vld [vmem:[%s5 + $0x180] sm:$0xff]
  %v111 = vld [vmem:[%s5 + $0x188] sm:$0xff]
  %v112 = vld [vmem:[%s5 + $0x190] sm:$0xff]
  %v113 = vld [vmem:[%s5 + $0x198] sm:$0xff]
  %v114 = vld [vmem:[%s5 + $0x1a0] sm:$0xff]
  %v115 = vld [vmem:[%s5 + $0x1a8] sm:$0xff]
  %v116 = vld [vmem:[%s5 + $0x1b0] sm:$0xff]
  %v117 = vld [vmem:[%s5 + $0x1b8] sm:$0xff]
  %v118 = vld [vmem:[%s5 + $0x1c0] sm:$0xff]
  %v119 = vld [vmem:[%s5 + $0x1c8] sm:$0xff]
  %v120 = vld [vmem:[%s5 + $0x1d0] sm:$0xff]
  %v121 = vld [vmem:[%s5 + $0x1d8] sm:$0xff]
  %v122 = vld [vmem:[%s5 + $0x1e0] sm:$0xff]
  %v123 = vld [vmem:[%s5 + $0x1e8] sm:$0xff]
  %v124 = vld [vmem:[%s5 + $0x1f0] sm:$0xff]
  %v125 = vld [vmem:[%s5 + $0x1f8] sm:$0xff]
  %v126 = vld [vmem:[%s6] sm:$0xff]
  %v127 = vld [vmem:[%s7] sm:$0xff]
  %v128 = vld [vmem:[%s7 + $0x8] sm:$0xff]
  %v129 = vld [vmem:[%s7 + $0x10] sm:$0xff]
  %v130 = vld [vmem:[%s7 + $0x18] sm:$0xff]
  %v131 = vld [vmem:[%s7 + $0x20] sm:$0xff]
  %v132 = vld [vmem:[%s7 + $0x28] sm:$0xff]
  %v133 = vld [vmem:[%s7 + $0x30] sm:$0xff]
  %v134 = vld [vmem:[%s7 + $0x38] sm:$0xff]
  %v135 = vld [vmem:[%s7 + $0x40] sm:$0xff]
  %v136 = vld [vmem:[%s7 + $0x48] sm:$0xff]
  %v137 = vld [vmem:[%s7 + $0x50] sm:$0xff]
  %v138 = vld [vmem:[%s7 + $0x58] sm:$0xff]
  %v139 = vld [vmem:[%s7 + $0x60] sm:$0xff]
  %v140 = vld [vmem:[%s7 + $0x68] sm:$0xff]
  %v141 = vld [vmem:[%s7 + $0x70] sm:$0xff]
  %v142 = vld [vmem:[%s7 + $0x78] sm:$0xff]
  %v143 = vld [vmem:[%s8] sm:$0x3]
  %v144 = vld [vmem:[%s9] sm:$0xf]
  %v145 = vld [vmem:[%s10] sm:$0xff]
  %v146 = vld [vmem:[%s11] sm:$0xf]
  %v147 = vld [vmem:[%s12] sm:$0xff]
  %v148 = vld [vmem:[%s13] sm:$0xff]
  %v149 = vld [vmem:[%s13 + $0x8] sm:$0xff]
  %v150 = vld [vmem:[%s13 + $0x10] sm:$0xff]
  %v151 = vld [vmem:[%s13 + $0x18] sm:$0xff]
  %v152 = vld [vmem:[%s13 + $0x20] sm:$0x1]
  %v153 = vld [vmem:[%s13 + $0x28] sm:$0x1]
  %v154 = vld [vmem:[%s13 + $0x30] sm:$0x1]
  %v155 = vld [vmem:[%s13 + $0x38] sm:$0x1]
  %v156 = vld [vmem:[%s14] sm:$0xff]
  %v157 = vld [vmem:[%s14 + $0x8] sm:$0x1]
  %v158 = vld [vmem:[%s15] sm:$0xf]
  %v159 = vld [vmem:[%s15 + $0x4] sm:$0xf]
  %v160 = vld [vmem:[%s15 + $0x8] sm:$0xf]
  %v161 = vld [vmem:[%s15 + $0xc] sm:$0xf]
  %v162 = vld [vmem:[%s15 + $0x10] sm:$0xf]
  %v163 = vld [vmem:[%s15 + $0x14] sm:$0xf]
  %v164 = vld [vmem:[%s15 + $0x18] sm:$0xf]
  %v165 = vld [vmem:[%s15 + $0x1c] sm:$0xf]
  %v166 = vld [vmem:[%s15 + $0x20] sm:$0xf]
  %v167 = vld [vmem:[%s15 + $0x24] sm:$0xf]
  %v168 = vld [vmem:[%s15 + $0x28] sm:$0xf]
  %v169 = vld [vmem:[%s15 + $0x2c] sm:$0xf]
  %v170 = vld [vmem:[%s15 + $0x30] sm:$0xf]
  %v171 = vld [vmem:[%s15 + $0x34] sm:$0xf]
  %v172 = vld [vmem:[%s15 + $0x38] sm:$0xf]
  %v173 = vld [vmem:[%s15 + $0x3c] sm:$0xf]
  %v174 = vld [vmem:[%s15 + $0x40] sm:$0xf]
  %v175 = vld [vmem:[%s15 + $0x44] sm:$0xf]
  %v176 = vld [vmem:[%s15 + $0x48] sm:$0xf]
  %v177 = vld [vmem:[%s15 + $0x4c] sm:$0xf]
  %v178 = vld [vmem:[%s15 + $0x50] sm:$0xf]
  %v179 = vld [vmem:[%s15 + $0x54] sm:$0xf]
  %v180 = vld [vmem:[%s15 + $0x58] sm:$0xf]
  %v181 = vld [vmem:[%s15 + $0x5c] sm:$0xf]
  %v182 = vld [vmem:[%s15 + $0x60] sm:$0xf]
  %v183 = vld [vmem:[%s15 + $0x64] sm:$0xf]
  %v184 = vld [vmem:[%s15 + $0x68] sm:$0xf]
  %v185 = vld [vmem:[%s15 + $0x6c] sm:$0xf]
  %v186 = vld [vmem:[%s15 + $0x70] sm:$0xf]
  %v187 = vld [vmem:[%s15 + $0x74] sm:$0xf]
  %v188 = vld [vmem:[%s15 + $0x78] sm:$0xf]
  %v189 = vld [vmem:[%s15 + $0x7c] sm:$0xf]
  %v190 = vld [vmem:[%s15 + $0x80] sm:$0xf]
  %v191 = vld [vmem:[%s15 + $0x84] sm:$0xf]
  %v192 = vld [vmem:[%s15 + $0x88] sm:$0xf]
  %v193 = vld [vmem:[%s15 + $0x8c] sm:$0xf]
  %v194 = vld [vmem:[%s15 + $0x90] sm:$0xf]
  %v195 = vld [vmem:[%s15 + $0x94] sm:$0xf]
  %v196 = vld [vmem:[%s15 + $0x98] sm:$0xf]
  %v197 = vld [vmem:[%s15 + $0x9c] sm:$0xf]
  %v198 = vld [vmem:[%s15 + $0xa0] sm:$0xf]
  %v199 = vld [vmem:[%s15 + $0xa4] sm:$0xf]
  %v200 = vld [vmem:[%s15 + $0xa8] sm:$0xf]
  %v201 = vld [vmem:[%s15 + $0xac] sm:$0xf]
  %v202 = vld [vmem:[%s15 + $0xb0] sm:$0xf]
  %v203 = vld [vmem:[%s15 + $0xb4] sm:$0xf]
  %v204 = vld [vmem:[%s15 + $0xb8] sm:$0xf]
  %v205 = vld [vmem:[%s15 + $0xbc] sm:$0xf]
  %v206 = vld [vmem:[%s15 + $0xc0] sm:$0xf]
  %v207 = vld [vmem:[%s15 + $0xc4] sm:$0xf]
  %v208 = vld [vmem:[%s15 + $0xc8] sm:$0xf]
  %v209 = vld [vmem:[%s15 + $0xcc] sm:$0xf]
  %v210 = vld [vmem:[%s15 + $0xd0] sm:$0xf]
  %v211 = vld [vmem:[%s15 + $0xd4] sm:$0xf]
  %v212 = vld [vmem:[%s15 + $0xd8] sm:$0xf]
  %v213 = vld [vmem:[%s15 + $0xdc] sm:$0xf]
  %v214 = vld [vmem:[%s15 + $0xe0] sm:$0xf]
  %v215 = vld [vmem:[%s15 + $0xe4] sm:$0xf]
  %v216 = vld [vmem:[%s15 + $0xe8] sm:$0xf]
  %v217 = vld [vmem:[%s15 + $0xec] sm:$0xf]
  %v218 = vld [vmem:[%s15 + $0xf0] sm:$0xf]
  %v219 = vld [vmem:[%s15 + $0xf4] sm:$0xf]
  %v220 = vld [vmem:[%s15 + $0xf8] sm:$0xf]
  %v221 = vld [vmem:[%s15 + $0xfc] sm:$0xf]
  %222 = vmatprep.subr.mxu0 0.0
  %223 = vmatpush1.msra.mxu0 %v62
  %224 = vmatprep.subr.mxu0 0.0
  %225 = vmatpush1.msra.mxu0 %v63
  %226 = vmatprep.subr.mxu0 0.0
  %227 = vmatpush1.msra.mxu0 %v64
  %228 = vmatprep.subr.mxu0 0.0
  %229 = vmatpush1.msra.mxu0 %v65
  %230 = vmatprep.subr.mxu0 0.0
  %231 = vmatpush1.msra.mxu0 %v66
  %232 = vmatprep.subr.mxu0 0.0
  %233 = vmatpush1.msra.mxu0 %v67
  %234 = vmatprep.subr.mxu0 0.0
  %235 = vmatpush1.msra.mxu0 %v68
  %236 = vmatprep.subr.mxu0 0.0
  %237 = vmatpush1.msra.mxu0 %v69
  %238 = vmatprep.subr.mxu0 0.0
  %239 = vmatpush1.msra.mxu0 %v70
  %240 = vmatprep.subr.mxu0 0.0
  %241 = vmatpush1.msra.mxu0 %v71
  %242 = vmatprep.subr.mxu0 0.0
  %243 = vmatpush1.msra.mxu0 %v72
  %244 = vmatprep.subr.mxu0 0.0
  %245 = vmatpush1.msra.mxu0 %v73
  %246 = vmatprep.subr.mxu0 0.0
  %247 = vmatpush1.msra.mxu0 %v74
  %248 = vmatprep.subr.mxu0 0.0
  %249 = vmatpush1.msra.mxu0 %v75
  %250 = vmatprep.subr.mxu0 0.0
  %251 = vmatpush1.msra.mxu0 %v76
  %252 = vmatprep.subr.mxu0 0.0
  %253 = vmatpush1.msra.mxu0 %v77
  %254 = vmatprep.subr.mxu0 0.0
  %255 = vmatpush1.msra.mxu0 %v78
  %256 = vmatprep.subr.mxu0 0.0
  %257 = vmatpush1.msra.mxu0 %v79
  %258 = vmatprep.subr.mxu0 0.0
  %259 = vmatpush1.msra.mxu0 %v80
  %260 = vmatprep.subr.mxu0 0.0
  %261 = vmatpush1.msra.mxu0 %v81
  %262 = vmatprep.subr.mxu0 0.0
  %263 = vmatpush1.msra.mxu0 %v82
  %264 = vmatprep.subr.mxu0 0.0
  %265 = vmatpush1.msra.mxu0 %v83
  %266 = vmatprep.subr.mxu0 0.0
  %267 = vmatpush1.msra.mxu0 %v84
  %268 = vmatprep.subr.mxu0 0.0
  %269 = vmatpush1.msra.mxu0 %v85
  %270 = vmatprep.subr.mxu0 0.0
  %271 = vmatpush1.msra.mxu0 %v86
  %272 = vmatprep.subr.mxu0 0.0
  %273 = vmatpush1.msra.mxu0 %v87
  %274 = vmatprep.subr.mxu0 0.0
  %275 = vmatpush1.msra.mxu0 %v88
  %276 = vmatprep.subr.mxu0 0.0
  %277 = vmatpush1.msra.mxu0 %v89
  %278 = vmatprep.subr.mxu0 0.0
  %279 = vmatpush1.msra.mxu0 %v90
  %280 = vmatprep.subr.mxu0 0.0
  %281 = vmatpush1.msra.mxu0 %v91
  %282 = vmatprep.subr.mxu0 0.0
  %283 = vmatpush1.msra.mxu0 %v92
  %284 = vmatprep.subr.mxu0 0.0
  %285 = vmatpush1.msra.mxu0 %v93
  %286 = vmatprep.mubr.f32.mxu0 %v55
  %287 = vmatmul.mubr.f32.gmra.mrb[0].mxu0 %v54
  %v288 = vpop.f32.mrb[0].mxu0
  %v289 = vadd.f32 0.0, %v288
  %v290 = vpop.f32.mrb[0].mxu0
  %291 = vdwg.mxu0
  %292 = vmatprep.subr.mxu0 0.0
  %293 = vmatpush1.msra.mxu0 %v94
  %294 = vmatprep.subr.mxu0 0.0
  %295 = vmatpush1.msra.mxu0 %v95
  %296 = vmatprep.subr.mxu0 0.0
  %297 = vmatpush1.msra.mxu0 %v96
  %298 = vmatprep.subr.mxu0 0.0
  %299 = vmatpush1.msra.mxu0 %v97
  %300 = vmatprep.subr.mxu0 0.0
  %301 = vmatpush1.msra.mxu0 %v98
  %302 = vmatprep.subr.mxu0 0.0
  %303 = vmatpush1.msra.mxu0 %v99
  %304 = vmatprep.subr.mxu0 0.0
  %305 = vmatpush1.msra.mxu0 %v100
  %306 = vmatprep.subr.mxu0 0.0
  %307 = vmatpush1.msra.mxu0 %v101
  %308 = vmatprep.subr.mxu0 0.0
  %309 = vmatpush1.msra.mxu0 %v102
  %310 = vmatprep.subr.mxu0 0.0
  %311 = vmatpush1.msra.mxu0 %v103
  %312 = vmatprep.subr.mxu0 0.0
  %313 = vmatpush1.msra.mxu0 %v104
  %314 = vmatprep.subr.mxu0 0.0
  %315 = vmatpush1.msra.mxu0 %v105
  %316 = vmatprep.subr.mxu0 0.0
  %317 = vmatpush1.msra.mxu0 %v106
  %318 = vmatprep.subr.mxu0 0.0
  %319 = vmatpush1.msra.mxu0 %v107
  %320 = vmatprep.subr.mxu0 0.0
  %321 = vmatpush1.msra.mxu0 %v108
  %322 = vmatprep.subr.mxu0 0.0
  %323 = vmatpush1.msra.mxu0 %v109
  %324 = vmatprep.subr.mxu0 0.0
  %325 = vmatpush1.msra.mxu0 %v110
  %326 = vmatprep.subr.mxu0 0.0
  %327 = vmatpush1.msra.mxu0 %v111
  %328 = vmatprep.subr.mxu0 0.0
  %329 = vmatpush1.msra.mxu0 %v112
  %330 = vmatprep.subr.mxu0 0.0
  %331 = vmatpush1.msra.mxu0 %v113
  %332 = vmatprep.subr.mxu0 0.0
  %333 = vmatpush1.msra.mxu0 %v114
  %334 = vmatprep.subr.mxu0 0.0
  %335 = vmatpush1.msra.mxu0 %v115
  %336 = vmatprep.subr.mxu0 0.0
  %337 = vmatpush1.msra.mxu0 %v116
  %338 = vmatprep.subr.mxu0 0.0
  %339 = vmatpush1.msra.mxu0 %v117
  %340 = vmatprep.subr.mxu0 0.0
  %341 = vmatpush1.msra.mxu0 %v118
  %342 = vmatprep.subr.mxu0 0.0
  %343 = vmatpush1.msra.mxu0 %v119
  %344 = vmatprep.subr.mxu0 0.0
  %345 = vmatpush1.msra.mxu0 %v120
  %346 = vmatprep.subr.mxu0 0.0
  %347 = vmatpush1.msra.mxu0 %v121
  %348 = vmatprep.subr.mxu0 0.0
  %349 = vmatpush1.msra.mxu0 %v122
  %350 = vmatprep.subr.mxu0 0.0
  %351 = vmatpush1.msra.mxu0 %v123
  %352 = vmatprep.subr.mxu0 0.0
  %353 = vmatpush1.msra.mxu0 %v124
  %354 = vmatprep.subr.mxu0 0.0
  %355 = vmatpush1.msra.mxu0 %v125
  %356 = vmatprep.mubr.f32.mxu0 %v57
  %357 = vmatmul.mubr.f32.gmra.mrb[0].mxu0 %v56
  %v358 = vpop.f32.mrb[0].mxu0
  %v359 = vadd.f32 %v289, %v358
  %v360 = vpop.f32.mrb[0].mxu0
  %361 = vdwg.mxu0
  %v363 = vcombine.high %v126, %v126
  %v365 = vunpack.c.l.s4 1983009808
  %v366 = vunpack.c.0.s8 %v365
  %v367 = vlaneseq
  %v368 = vshrl.u32 %v367, 7
  %v369 = vsub.s32 %v366, %v368
  %v370 = vrot.slane %v126, %v369
  %v372 = vunpack.c.l.s4 1983009808
  %v373 = vunpack.c.0.s8 %v372
  %v374 = vlaneseq
  %v375 = vshrl.u32 %v374, 7
  %v376 = vsub.s32 %v373, %v375
  %v377 = vrot.slane %v363, %v376
  %v378 = vcombine.high %v370, %v370
  %v379 = vcombine.high %v377, %v377
  %vm380 = vcmask 15360
  %v382 = vsel %vm380, %v359, 0
  %vm384 = vcmask 1041408
  %v385 = vsel %vm384, %v370, 0
  %v387 = vsel %vm384, %v378, 0
  %v389 = vsel %vm384, %v377, 0
  %v391 = vsel %vm384, %v379, 0
  %393 = vmatprep.subr.mxu0 %v387
  %394 = vmatpush1.msra.mxu0 %v385
  %395 = vmatprep.subr.mxu0 0.0
  %396 = vmatpush1.msra.mxu0 0.0
  %397 = vmatprep.subr.mxu0 0.0
  %398 = vmatpush1.msra.mxu0 0.0
  %399 = vmatprep.subr.mxu0 0.0
  %400 = vmatpush1.msra.mxu0 0.0
  %401 = vmatprep.subr.mxu0 0.0
  %402 = vmatpush1.msra.mxu0 0.0
  %403 = vmatprep.subr.mxu0 0.0
  %404 = vmatpush1.msra.mxu0 0.0
  %405 = vmatprep.subr.mxu0 0.0
  %406 = vmatpush1.msra.mxu0 0.0
  %407 = vmatprep.subr.mxu0 0.0
  %408 = vmatpush1.msra.mxu0 0.0
  %409 = vmatprep.subr.mxu0 0.0
  %410 = vmatpush1.msra.mxu0 0.0
  %411 = vmatprep.subr.mxu0 0.0
  %412 = vmatpush1.msra.mxu0 0.0
  %413 = vmatprep.subr.mxu0 0.0
  %414 = vmatpush1.msra.mxu0 0.0
  %415 = vmatprep.subr.mxu0 0.0
  %416 = vmatpush1.msra.mxu0 0.0
  %417 = vmatprep.subr.mxu0 0.0
  %418 = vmatpush1.msra.mxu0 0.0
  %419 = vmatprep.subr.mxu0 0.0
  %420 = vmatpush1.msra.mxu0 0.0
  %421 = vmatprep.subr.mxu0 0.0
  %422 = vmatpush1.msra.mxu0 0.0
  %423 = vmatprep.subr.mxu0 0.0
  %424 = vmatpush1.msra.mxu0 0.0
  %425 = vmatprep.subr.mxu0 0.0
  %426 = vmatpush1.msra.mxu0 0.0
  %427 = vmatprep.subr.mxu0 0.0
  %428 = vmatpush1.msra.mxu0 0.0
  %429 = vmatprep.subr.mxu0 0.0
  %430 = vmatpush1.msra.mxu0 0.0
  %431 = vmatprep.subr.mxu0 0.0
  %432 = vmatpush1.msra.mxu0 0.0
  %433 = vmatprep.subr.mxu0 0.0
  %434 = vmatpush1.msra.mxu0 0.0
  %435 = vmatprep.subr.mxu0 0.0
  %436 = vmatpush1.msra.mxu0 0.0
  %437 = vmatprep.subr.mxu0 0.0
  %438 = vmatpush1.msra.mxu0 0.0
  %439 = vmatprep.subr.mxu0 0.0
  %440 = vmatpush1.msra.mxu0 0.0
  %441 = vmatprep.subr.mxu0 0.0
  %442 = vmatpush1.msra.mxu0 0.0
  %443 = vmatprep.subr.mxu0 0.0
  %444 = vmatpush1.msra.mxu0 0.0
  %445 = vmatprep.subr.mxu0 0.0
  %446 = vmatpush1.msra.mxu0 0.0
  %447 = vmatprep.subr.mxu0 0.0
  %448 = vmatpush1.msra.mxu0 0.0
  %449 = vmatprep.subr.mxu0 0.0
  %450 = vmatpush1.msra.mxu0 0.0
  %451 = vmatprep.subr.mxu0 0.0
  %452 = vmatpush1.msra.mxu0 0.0
  %453 = vmatprep.subr.mxu0 0.0
  %454 = vmatpush1.msra.mxu0 0.0
  %455 = vmatprep.subr.mxu0 0.0
  %456 = vmatpush1.msra.mxu0 0.0
  %457 = vmatprep.mubr.f32.mxu0 0.0
  %458 = vmatmul.mubr.f32.gmra.mrb[0].mxu0 %v382
  %v459 = vpop.f32.mrb[0].mxu0
  %v460 = vadd.f32 0.0, %v459
  %v461 = vpop.f32.mrb[0].mxu0
  %v462 = vadd.f32 0.0, %v461
  %463 = vdwg.mxu0
  %464 = vmatprep.subr.mxu0 %v391
  %465 = vmatpush1.msra.mxu0 %v389
  %466 = vmatprep.subr.mxu0 0.0
  %467 = vmatpush1.msra.mxu0 0.0
  %468 = vmatprep.subr.mxu0 0.0
  %469 = vmatpush1.msra.mxu0 0.0
  %470 = vmatprep.subr.mxu0 0.0
  %471 = vmatpush1.msra.mxu0 0.0
  %472 = vmatprep.subr.mxu0 0.0
  %473 = vmatpush1.msra.mxu0 0.0
  %474 = vmatprep.subr.mxu0 0.0
  %475 = vmatpush1.msra.mxu0 0.0
  %476 = vmatprep.subr.mxu0 0.0
  %477 = vmatpush1.msra.mxu0 0.0
  %478 = vmatprep.subr.mxu0 0.0
  %479 = vmatpush1.msra.mxu0 0.0
  %480 = vmatprep.subr.mxu0 0.0
  %481 = vmatpush1.msra.mxu0 0.0
  %482 = vmatprep.subr.mxu0 0.0
  %483 = vmatpush1.msra.mxu0 0.0
  %484 = vmatprep.subr.mxu0 0.0
  %485 = vmatpush1.msra.mxu0 0.0
  %486 = vmatprep.subr.mxu0 0.0
  %487 = vmatpush1.msra.mxu0 0.0
  %488 = vmatprep.subr.mxu0 0.0
  %489 = vmatpush1.msra.mxu0 0.0
  %490 = vmatprep.subr.mxu0 0.0
  %491 = vmatpush1.msra.mxu0 0.0
  %492 = vmatprep.subr.mxu0 0.0
  %493 = vmatpush1.msra.mxu0 0.0
  %494 = vmatprep.subr.mxu0 0.0
  %495 = vmatpush1.msra.mxu0 0.0
  %496 = vmatprep.subr.mxu0 0.0
  %497 = vmatpush1.msra.mxu0 0.0
  %498 = vmatprep.subr.mxu0 0.0
  %499 = vmatpush1.msra.mxu0 0.0
  %500 = vmatprep.subr.mxu0 0.0
  %501 = vmatpush1.msra.mxu0 0.0
  %502 = vmatprep.subr.mxu0 0.0
  %503 = vmatpush1.msra.mxu0 0.0
  %504 = vmatprep.subr.mxu0 0.0
  %505 = vmatpush1.msra.mxu0 0.0
  %506 = vmatprep.subr.mxu0 0.0
  %507 = vmatpush1.msra.mxu0 0.0
  %508 = vmatprep.subr.mxu0 0.0
  %509 = vmatpush1.msra.mxu0 0.0
  %510 = vmatprep.subr.mxu0 0.0
  %511 = vmatpush1.msra.mxu0 0.0
  %512 = vmatprep.subr.mxu0 0.0
  %513 = vmatpush1.msra.mxu0 0.0
  %514 = vmatprep.subr.mxu0 0.0
  %515 = vmatpush1.msra.mxu0 0.0
  %516 = vmatprep.subr.mxu0 0.0
  %517 = vmatpush1.msra.mxu0 0.0
  %518 = vmatprep.subr.mxu0 0.0
  %519 = vmatpush1.msra.mxu0 0.0
  %520 = vmatprep.subr.mxu0 0.0
  %521 = vmatpush1.msra.mxu0 0.0
  %522 = vmatprep.subr.mxu0 0.0
  %523 = vmatpush1.msra.mxu0 0.0
  %524 = vmatprep.subr.mxu0 0.0
  %525 = vmatpush1.msra.mxu0 0.0
  %526 = vmatprep.subr.mxu0 0.0
  %527 = vmatpush1.msra.mxu0 0.0
  %528 = vmatprep.mubr.f32.mxu0 0.0
  %529 = vmatmul.mubr.f32.gmra.mrb[0].mxu0 %v382
  %v530 = vpop.f32.mrb[0].mxu0
  %v531 = vadd.f32 0.0, %v530
  %v532 = vpop.f32.mrb[0].mxu0
  %v533 = vadd.f32 0.0, %v532
  %534 = vdwg.mxu0
  %v535 = vsub.f32 %v54, %v460
  %v536 = vsub.f32 %v55, %v462
  %v537 = vsub.f32 %v56, %v531
  %v538 = vsub.f32 %v57, %v533
  %v539 = vmul.f32 %v535, %v535
  %v540 = vmul.f32 %v536, %v536
  %v541 = vmul.f32 %v537, %v537
  %v542 = vmul.f32 %v538, %v538
  %543 = vmatprep.subr.mxu0 0.0
  %544 = vmatpush1.msra.mxu0 %v62
  %545 = vmatprep.subr.mxu0 0.0
  %546 = vmatpush1.msra.mxu0 %v63
  %547 = vmatprep.subr.mxu0 0.0
  %548 = vmatpush1.msra.mxu0 %v64
  %549 = vmatprep.subr.mxu0 0.0
  %550 = vmatpush1.msra.mxu0 %v65
  %551 = vmatprep.subr.mxu0 0.0
  %552 = vmatpush1.msra.mxu0 %v66
  %553 = vmatprep.subr.mxu0 0.0
  %554 = vmatpush1.msra.mxu0 %v67
  %555 = vmatprep.subr.mxu0 0.0
  %556 = vmatpush1.msra.mxu0 %v68
  %557 = vmatprep.subr.mxu0 0.0
  %558 = vmatpush1.msra.mxu0 %v69
  %559 = vmatprep.subr.mxu0 0.0
  %560 = vmatpush1.msra.mxu0 %v70
  %561 = vmatprep.subr.mxu0 0.0
  %562 = vmatpush1.msra.mxu0 %v71
  %563 = vmatprep.subr.mxu0 0.0
  %564 = vmatpush1.msra.mxu0 %v72
  %565 = vmatprep.subr.mxu0 0.0
  %566 = vmatpush1.msra.mxu0 %v73
  %567 = vmatprep.subr.mxu0 0.0
  %568 = vmatpush1.msra.mxu0 %v74
  %569 = vmatprep.subr.mxu0 0.0
  %570 = vmatpush1.msra.mxu0 %v75
  %571 = vmatprep.subr.mxu0 0.0
  %572 = vmatpush1.msra.mxu0 %v76
  %573 = vmatprep.subr.mxu0 0.0
  %574 = vmatpush1.msra.mxu0 %v77
  %575 = vmatprep.subr.mxu0 0.0
  %576 = vmatpush1.msra.mxu0 %v78
  %577 = vmatprep.subr.mxu0 0.0
  %578 = vmatpush1.msra.mxu0 %v79
  %579 = vmatprep.subr.mxu0 0.0
  %580 = vmatpush1.msra.mxu0 %v80
  %581 = vmatprep.subr.mxu0 0.0
  %582 = vmatpush1.msra.mxu0 %v81
  %583 = vmatprep.subr.mxu0 0.0
  %584 = vmatpush1.msra.mxu0 %v82
  %585 = vmatprep.subr.mxu0 0.0
  %586 = vmatpush1.msra.mxu0 %v83
  %587 = vmatprep.subr.mxu0 0.0
  %588 = vmatpush1.msra.mxu0 %v84
  %589 = vmatprep.subr.mxu0 0.0
  %590 = vmatpush1.msra.mxu0 %v85
  %591 = vmatprep.subr.mxu0 0.0
  %592 = vmatpush1.msra.mxu0 %v86
  %593 = vmatprep.subr.mxu0 0.0
  %594 = vmatpush1.msra.mxu0 %v87
  %595 = vmatprep.subr.mxu0 0.0
  %596 = vmatpush1.msra.mxu0 %v88
  %597 = vmatprep.subr.mxu0 0.0
  %598 = vmatpush1.msra.mxu0 %v89
  %599 = vmatprep.subr.mxu0 0.0
  %600 = vmatpush1.msra.mxu0 %v90
  %601 = vmatprep.subr.mxu0 0.0
  %602 = vmatpush1.msra.mxu0 %v91
  %603 = vmatprep.subr.mxu0 0.0
  %604 = vmatpush1.msra.mxu0 %v92
  %605 = vmatprep.subr.mxu0 0.0
  %606 = vmatpush1.msra.mxu0 %v93
  %607 = vmatprep.mubr.f32.mxu0 %v540
  %608 = vmatmul.mubr.f32.gmra.mrb[0].mxu0 %v539
  %v609 = vpop.f32.mrb[0].mxu0
  %v610 = vadd.f32 1e-05, %v609
  %v611 = vpop.f32.mrb[0].mxu0
  %612 = vdwg.mxu0
  %613 = vmatprep.subr.mxu0 0.0
  %614 = vmatpush1.msra.mxu0 %v94
  %615 = vmatprep.subr.mxu0 0.0
  %616 = vmatpush1.msra.mxu0 %v95
  %617 = vmatprep.subr.mxu0 0.0
  %618 = vmatpush1.msra.mxu0 %v96
  %619 = vmatprep.subr.mxu0 0.0
  %620 = vmatpush1.msra.mxu0 %v97
  %621 = vmatprep.subr.mxu0 0.0
  %622 = vmatpush1.msra.mxu0 %v98
  %623 = vmatprep.subr.mxu0 0.0
  %624 = vmatpush1.msra.mxu0 %v99
  %625 = vmatprep.subr.mxu0 0.0
  %626 = vmatpush1.msra.mxu0 %v100
  %627 = vmatprep.subr.mxu0 0.0
  %628 = vmatpush1.msra.mxu0 %v101
  %629 = vmatprep.subr.mxu0 0.0
  %630 = vmatpush1.msra.mxu0 %v102
  %631 = vmatprep.subr.mxu0 0.0
  %632 = vmatpush1.msra.mxu0 %v103
  %633 = vmatprep.subr.mxu0 0.0
  %634 = vmatpush1.msra.mxu0 %v104
  %635 = vmatprep.subr.mxu0 0.0
  %636 = vmatpush1.msra.mxu0 %v105
  %637 = vmatprep.subr.mxu0 0.0
  %638 = vmatpush1.msra.mxu0 %v106
  %639 = vmatprep.subr.mxu0 0.0
  %640 = vmatpush1.msra.mxu0 %v107
  %641 = vmatprep.subr.mxu0 0.0
  %642 = vmatpush1.msra.mxu0 %v108
  %643 = vmatprep.subr.mxu0 0.0
  %644 = vmatpush1.msra.mxu0 %v109
  %645 = vmatprep.subr.mxu0 0.0
  %646 = vmatpush1.msra.mxu0 %v110
  %647 = vmatprep.subr.mxu0 0.0
  %648 = vmatpush1.msra.mxu0 %v111
  %649 = vmatprep.subr.mxu0 0.0
  %650 = vmatpush1.msra.mxu0 %v112
  %651 = vmatprep.subr.mxu0 0.0
  %652 = vmatpush1.msra.mxu0 %v113
  %653 = vmatprep.subr.mxu0 0.0
  %654 = vmatpush1.msra.mxu0 %v114
  %655 = vmatprep.subr.mxu0 0.0
  %656 = vmatpush1.msra.mxu0 %v115
  %657 = vmatprep.subr.mxu0 0.0
  %658 = vmatpush1.msra.mxu0 %v116
  %659 = vmatprep.subr.mxu0 0.0
  %660 = vmatpush1.msra.mxu0 %v117
  %661 = vmatprep.subr.mxu0 0.0
  %662 = vmatpush1.msra.mxu0 %v118
  %663 = vmatprep.subr.mxu0 0.0
  %664 = vmatpush1.msra.mxu0 %v119
  %665 = vmatprep.subr.mxu0 0.0
  %666 = vmatpush1.msra.mxu0 %v120
  %667 = vmatprep.subr.mxu0 0.0
  %668 = vmatpush1.msra.mxu0 %v121
  %669 = vmatprep.subr.mxu0 0.0
  %670 = vmatpush1.msra.mxu0 %v122
  %671 = vmatprep.subr.mxu0 0.0
  %672 = vmatpush1.msra.mxu0 %v123
  %673 = vmatprep.subr.mxu0 0.0
  %674 = vmatpush1.msra.mxu0 %v124
  %675 = vmatprep.subr.mxu0 0.0
  %676 = vmatpush1.msra.mxu0 %v125
  %677 = vmatprep.mubr.f32.mxu0 %v542
  %678 = vmatmul.mubr.f32.gmra.mrb[0].mxu0 %v541
  %v679 = vpop.f32.mrb[0].mxu0
  %v680 = vadd.f32 %v610, %v679
  %v681 = vpop.f32.mrb[0].mxu0
  %682 = vdwg.mxu0
  %v683 = vrsqrt.pop %v680
  %v685 = vsel %vm380, %v683, 0
  %687 = vmatprep.subr.mxu0 %v387
  %688 = vmatpush1.msra.mxu0 %v385
  %689 = vmatprep.subr.mxu0 0.0
  %690 = vmatpush1.msra.mxu0 0.0
  %691 = vmatprep.subr.mxu0 0.0
  %692 = vmatpush1.msra.mxu0 0.0
  %693 = vmatprep.subr.mxu0 0.0
  %694 = vmatpush1.msra.mxu0 0.0
  %695 = vmatprep.subr.mxu0 0.0
  %696 = vmatpush1.msra.mxu0 0.0
  %697 = vmatprep.subr.mxu0 0.0
  %698 = vmatpush1.msra.mxu0 0.0
  %699 = vmatprep.subr.mxu0 0.0
  %700 = vmatpush1.msra.mxu0 0.0
  %701 = vmatprep.subr.mxu0 0.0
  %702 = vmatpush1.msra.mxu0 0.0
  %703 = vmatprep.subr.mxu0 0.0
  %704 = vmatpush1.msra.mxu0 0.0
  %705 = vmatprep.subr.mxu0 0.0
  %706 = vmatpush1.msra.mxu0 0.0
  %707 = vmatprep.subr.mxu0 0.0
  %708 = vmatpush1.msra.mxu0 0.0
  %709 = vmatprep.subr.mxu0 0.0
  %710 = vmatpush1.msra.mxu0 0.0
  %711 = vmatprep.subr.mxu0 0.0
  %712 = vmatpush1.msra.mxu0 0.0
  %713 = vmatprep.subr.mxu0 0.0
  %714 = vmatpush1.msra.mxu0 0.0
  %715 = vmatprep.subr.mxu0 0.0
  %716 = vmatpush1.msra.mxu0 0.0
  %717 = vmatprep.subr.mxu0 0.0
  %718 = vmatpush1.msra.mxu0 0.0
  %719 = vmatprep.subr.mxu0 0.0
  %720 = vmatpush1.msra.mxu0 0.0
  %721 = vmatprep.subr.mxu0 0.0
  %722 = vmatpush1.msra.mxu0 0.0
  %723 = vmatprep.subr.mxu0 0.0
  %724 = vmatpush1.msra.mxu0 0.0
  %725 = vmatprep.subr.mxu0 0.0
  %726 = vmatpush1.msra.mxu0 0.0
  %727 = vmatprep.subr.mxu0 0.0
  %728 = vmatpush1.msra.mxu0 0.0
  %729 = vmatprep.subr.mxu0 0.0
  %730 = vmatpush1.msra.mxu0 0.0
  %731 = vmatprep.subr.mxu0 0.0
  %732 = vmatpush1.msra.mxu0 0.0
  %733 = vmatprep.subr.mxu0 0.0
  %734 = vmatpush1.msra.mxu0 0.0
  %735 = vmatprep.subr.mxu0 0.0
  %736 = vmatpush1.msra.mxu0 0.0
  %737 = vmatprep.subr.mxu0 0.0
  %738 = vmatpush1.msra.mxu0 0.0
  %739 = vmatprep.subr.mxu0 0.0
  %740 = vmatpush1.msra.mxu0 0.0
  %741 = vmatprep.subr.mxu0 0.0
  %742 = vmatpush1.msra.mxu0 0.0
  %743 = vmatprep.subr.mxu0 0.0
  %744 = vmatpush1.msra.mxu0 0.0
  %745 = vmatprep.subr.mxu0 0.0
  %746 = vmatpush1.msra.mxu0 0.0
  %747 = vmatprep.subr.mxu0 0.0
  %748 = vmatpush1.msra.mxu0 0.0
  %749 = vmatprep.subr.mxu0 0.0
  %750 = vmatpush1.msra.mxu0 0.0
  %751 = vmatprep.mubr.f32.mxu0 0.0
  %752 = vmatmul.mubr.f32.gmra.mrb[0].mxu0 %v685
  %v753 = vpop.f32.mrb[0].mxu0
  %v754 = vadd.f32 0.0, %v753
  %v755 = vpop.f32.mrb[0].mxu0
  %v756 = vadd.f32 0.0, %v755
  %757 = vdwg.mxu0
  %758 = vmatprep.subr.mxu0 %v391
  %759 = vmatpush1.msra.mxu0 %v389
  %760 = vmatprep.subr.mxu0 0.0
  %761 = vmatpush1.msra.mxu0 0.0
  %762 = vmatprep.subr.mxu0 0.0
  %763 = vmatpush1.msra.mxu0 0.0
  %764 = vmatprep.subr.mxu0 0.0
  %765 = vmatpush1.msra.mxu0 0.0
  %766 = vmatprep.subr.mxu0 0.0
  %767 = vmatpush1.msra.mxu0 0.0
  %768 = vmatprep.subr.mxu0 0.0
  %769 = vmatpush1.msra.mxu0 0.0
  %770 = vmatprep.subr.mxu0 0.0
  %771 = vmatpush1.msra.mxu0 0.0
  %772 = vmatprep.subr.mxu0 0.0
  %773 = vmatpush1.msra.mxu0 0.0
  %774 = vmatprep.subr.mxu0 0.0
  %775 = vmatpush1.msra.mxu0 0.0
  %776 = vmatprep.subr.mxu0 0.0
  %777 = vmatpush1.msra.mxu0 0.0
  %778 = vmatprep.subr.mxu0 0.0
  %779 = vmatpush1.msra.mxu0 0.0
  %780 = vmatprep.subr.mxu0 0.0
  %781 = vmatpush1.msra.mxu0 0.0
  %782 = vmatprep.subr.mxu0 0.0
  %783 = vmatpush1.msra.mxu0 0.0
  %784 = vmatprep.subr.mxu0 0.0
  %785 = vmatpush1.msra.mxu0 0.0
  %786 = vmatprep.subr.mxu0 0.0
  %787 = vmatpush1.msra.mxu0 0.0
  %788 = vmatprep.subr.mxu0 0.0
  %789 = vmatpush1.msra.mxu0 0.0
  %790 = vmatprep.subr.mxu0 0.0
  %791 = vmatpush1.msra.mxu0 0.0
  %792 = vmatprep.subr.mxu0 0.0
  %793 = vmatpush1.msra.mxu0 0.0
  %794 = vmatprep.subr.mxu0 0.0
  %795 = vmatpush1.msra.mxu0 0.0
  %796 = vmatprep.subr.mxu0 0.0
  %797 = vmatpush1.msra.mxu0 0.0
  %798 = vmatprep.subr.mxu0 0.0
  %799 = vmatpush1.msra.mxu0 0.0
  %800 = vmatprep.subr.mxu0 0.0
  %801 = vmatpush1.msra.mxu0 0.0
  %802 = vmatprep.subr.mxu0 0.0
  %803 = vmatpush1.msra.mxu0 0.0
  %804 = vmatprep.subr.mxu0 0.0
  %805 = vmatpush1.msra.mxu0 0.0
  %806 = vmatprep.subr.mxu0 0.0
  %807 = vmatpush1.msra.mxu0 0.0
  %808 = vmatprep.subr.mxu0 0.0
  %809 = vmatpush1.msra.mxu0 0.0
  %810 = vmatprep.subr.mxu0 0.0
  %811 = vmatpush1.msra.mxu0 0.0
  %812 = vmatprep.subr.mxu0 0.0
  %813 = vmatpush1.msra.mxu0 0.0
  %814 = vmatprep.subr.mxu0 0.0
  %815 = vmatpush1.msra.mxu0 0.0
  %816 = vmatprep.subr.mxu0 0.0
  %817 = vmatpush1.msra.mxu0 0.0
  %818 = vmatprep.subr.mxu0 0.0
  %819 = vmatpush1.msra.mxu0 0.0
  %820 = vmatprep.subr.mxu0 0.0
  %821 = vmatpush1.msra.mxu0 0.0
  %822 = vmatprep.mubr.f32.mxu0 0.0
  %823 = vmatmul.mubr.f32.gmra.mrb[0].mxu0 %v685
  %v824 = vpop.f32.mrb[0].mxu0
  %v825 = vadd.f32 0.0, %v824
  %v826 = vpop.f32.mrb[0].mxu0
  %v827 = vadd.f32 0.0, %v826
  %828 = vdwg.mxu0
  %v829 = vmul.f32 %v535, %v754
  %v830 = vmul.f32 %v536, %v756
  %v831 = vmul.f32 %v537, %v825
  %v832 = vmul.f32 %v538, %v827
  %834 = vset.pattern.permute.xlu0 0
  %835 = vperm.xlu0 %834, %v58
  %v836 = vpop.permute.xlu0 %835
  %v838 = vmul.f32 %v829, %v836
  %v839 = vmul.f32 %v830, %v836
  %v840 = vmul.f32 %v831, %v836
  %v841 = vmul.f32 %v832, %v836
  %843 = vset.pattern.permute.xlu0 0
  %844 = vperm.xlu0 %843, %v59
  %v845 = vpop.permute.xlu0 %844
  %v847 = vadd.f32 %v838, %v845
  %v848 = vadd.f32 %v839, %v845
  %v849 = vadd.f32 %v840, %v845
  %v850 = vadd.f32 %v841, %v845
  %vm851 = vcmp.ge.f32.partialorder %v847, 0.0
  %vm852 = vcmp.ge.f32.partialorder %v848, 0.0
  %vm853 = vcmp.ge.f32.partialorder %v849, 0.0
  %vm854 = vcmp.ge.f32.partialorder %v850, 0.0
  %v855 = vmul.f32 %v847, 0.2
  %v856 = vmul.f32 %v848, 0.2
  %v857 = vmul.f32 %v849, 0.2
  %v858 = vmul.f32 %v850, 0.2
  %v859 = vsel %vm851, %v847, %v855
  %v860 = vsel %vm852, %v848, %v856
  %v861 = vsel %vm853, %v849, %v857
  %v862 = vsel %vm854, %v850, %v858
  %863 = vrot.lane.b32.xlu0 %v859, 17
  %v864 = vpop.permute.xlu0 %863
  %865 = vrot.lane.b32.xlu0 %v860, 17
  %v866 = vpop.permute.xlu0 %865
  %867 = vrot.lane.b32.xlu0 %v861, 17
  %v868 = vpop.permute.xlu0 %867
  %869 = vrot.lane.b32.xlu0 %v862, 17
  %v870 = vpop.permute.xlu0 %869
  %v871 = vlaneseq
  %v872 = vand.u32 %v871, 127
  %vm873 = vcmp.lt.s32.totalorder %v872, 17
  %v874 = vsel %vm873, %v868, %v870
  %v875 = vsel %vm873, %v866, %v868
  %v876 = vsel %vm873, %v864, %v866
  %v877 = vsel %vm873, %v870, %v864
  %v878 = vlaneseq
  %v879 = vshrl.u32 %v878, 7
  %v880 = vsub.s32 0, %v879
  %v881 = vrot.slane %v148, %v880
  %v882 = vlaneseq
  %v883 = vshrl.u32 %v882, 7
  %v884 = vsub.s32 0, %v883
  %v885 = vrot.slane %v149, %v884
  %v886 = vlaneseq
  %v887 = vshrl.u32 %v886, 7
  %v888 = vsub.s32 0, %v887
  %v889 = vrot.slane %v150, %v888
  %v890 = vlaneseq
  %v891 = vshrl.u32 %v890, 7
  %v892 = vsub.s32 0, %v891
  %v893 = vrot.slane %v151, %v892
  %v894 = vmul.f32 %v877, %v881
  %v895 = vmul.f32 %v876, %v885
  %v896 = vmul.f32 %v875, %v889
  %v897 = vmul.f32 %v874, %v893
  %898 = vrot.lane.b32.xlu0 %v859, 16
  %v899 = vpop.permute.xlu0 %898
  %900 = vrot.lane.b32.xlu0 %v860, 16
  %v901 = vpop.permute.xlu0 %900
  %902 = vrot.lane.b32.xlu0 %v861, 16
  %v903 = vpop.permute.xlu0 %902
  %904 = vrot.lane.b32.xlu0 %v862, 16
  %v905 = vpop.permute.xlu0 %904
  %vm906 = vcmp.lt.s32.totalorder %v872, 16
  %v907 = vsel %vm906, %v903, %v905
  %v908 = vsel %vm906, %v901, %v903
  %v909 = vsel %vm906, %v899, %v901
  %v910 = vsel %vm906, %v905, %v899
  %v911 = vlaneseq
  %v912 = vshrl.u32 %v911, 7
  %v913 = vsub.s32 1, %v912
  %v914 = vrot.slane %v148, %v913
  %v915 = vlaneseq
  %v916 = vshrl.u32 %v915, 7
  %v917 = vsub.s32 1, %v916
  %v918 = vrot.slane %v149, %v917
  %v919 = vlaneseq
  %v920 = vshrl.u32 %v919, 7
  %v921 = vsub.s32 1, %v920
  %v922 = vrot.slane %v150, %v921
  %v923 = vlaneseq
  %v924 = vshrl.u32 %v923, 7
  %v925 = vsub.s32 1, %v924
  %v926 = vrot.slane %v151, %v925
  %v927 = vmul.f32 %v910, %v914
  %v928 = vmul.f32 %v909, %v918
  %v929 = vmul.f32 %v908, %v922
  %v930 = vmul.f32 %v907, %v926
  %931 = vrot.lane.b32.xlu0 %v859, 15
  %v932 = vpop.permute.xlu0 %931
  %933 = vrot.lane.b32.xlu0 %v860, 15
  %v934 = vpop.permute.xlu0 %933
  %935 = vrot.lane.b32.xlu0 %v861, 15
  %v936 = vpop.permute.xlu0 %935
  %937 = vrot.lane.b32.xlu0 %v862, 15
  %v938 = vpop.permute.xlu0 %937
  %vm939 = vcmp.lt.s32.totalorder %v872, 15
  %v940 = vsel %vm939, %v936, %v938
  %v941 = vsel %vm939, %v934, %v936
  %v942 = vsel %vm939, %v932, %v934
  %v943 = vsel %vm939, %v938, %v932
  %v944 = vlaneseq
  %v945 = vshrl.u32 %v944, 7
  %v946 = vsub.s32 2, %v945
  %v947 = vrot.slane %v148, %v946
  %v948 = vlaneseq
  %v949 = vshrl.u32 %v948, 7
  %v950 = vsub.s32 2, %v949
  %v951 = vrot.slane %v149, %v950
  %v952 = vlaneseq
  %v953 = vshrl.u32 %v952, 7
  %v954 = vsub.s32 2, %v953
  %v955 = vrot.slane %v150, %v954
  %v956 = vlaneseq
  %v957 = vshrl.u32 %v956, 7
  %v958 = vsub.s32 2, %v957
  %v959 = vrot.slane %v151, %v958
  %v960 = vmul.f32 %v943, %v947
  %v961 = vmul.f32 %v942, %v951
  %v962 = vmul.f32 %v941, %v955
  %v963 = vmul.f32 %v940, %v959
  %964 = vrot.lane.b32.xlu0 %v859, 1
  %v965 = vpop.permute.xlu0 %964
  %966 = vrot.lane.b32.xlu0 %v860, 1
  %v967 = vpop.permute.xlu0 %966
  %968 = vrot.lane.b32.xlu0 %v861, 1
  %v969 = vpop.permute.xlu0 %968
  %970 = vrot.lane.b32.xlu0 %v862, 1
  %v971 = vpop.permute.xlu0 %970
  %vm972 = vcmp.lt.s32.totalorder %v872, 1
  %v973 = vsel %vm972, %v969, %v971
  %v974 = vsel %vm972, %v967, %v969
  %v975 = vsel %vm972, %v965, %v967
  %v976 = vsel %vm972, %v971, %v965
  %v977 = vlaneseq
  %v978 = vshrl.u32 %v977, 7
  %v979 = vsub.s32 3, %v978
  %v980 = vrot.slane %v148, %v979
  %v981 = vlaneseq
  %v982 = vshrl.u32 %v981, 7
  %v983 = vsub.s32 3, %v982
  %v984 = vrot.slane %v149, %v983
  %v985 = vlaneseq
  %v986 = vshrl.u32 %v985, 7
  %v987 = vsub.s32 3, %v986
  %v988 = vrot.slane %v150, %v987
  %v989 = vlaneseq
  %v990 = vshrl.u32 %v989, 7
  %v991 = vsub.s32 3, %v990
  %v992 = vrot.slane %v151, %v991
  %v993 = vmul.f32 %v976, %v980
  %v994 = vmul.f32 %v975, %v984
  %v995 = vmul.f32 %v974, %v988
  %v996 = vmul.f32 %v973, %v992
  %997 = vrot.lane.b32.xlu0 %v859, 127
  %v998 = vpop.permute.xlu0 %997
  %999 = vrot.lane.b32.xlu0 %v860, 127
  %v1000 = vpop.permute.xlu0 %999
  %1001 = vrot.lane.b32.xlu0 %v861, 127
  %v1002 = vpop.permute.xlu0 %1001
  %1003 = vrot.lane.b32.xlu0 %v862, 127
  %v1004 = vpop.permute.xlu0 %1003
  %vm1005 = vcmp.lt.s32.totalorder %v872, 127
  %v1006 = vsel %vm1005, %v1002, %v1004
  %v1007 = vsel %vm1005, %v1000, %v1002
  %v1008 = vsel %vm1005, %v998, %v1000
  %v1009 = vsel %vm1005, %v1004, %v998
  %v1010 = vlaneseq
  %v1011 = vshrl.u32 %v1010, 7
  %v1012 = vsub.s32 5, %v1011
  %v1013 = vrot.slane %v148, %v1012
  %v1014 = vlaneseq
  %v1015 = vshrl.u32 %v1014, 7
  %v1016 = vsub.s32 5, %v1015
  %v1017 = vrot.slane %v149, %v1016
  %v1018 = vlaneseq
  %v1019 = vshrl.u32 %v1018, 7
  %v1020 = vsub.s32 5, %v1019
  %v1021 = vrot.slane %v150, %v1020
  %v1022 = vlaneseq
  %v1023 = vshrl.u32 %v1022, 7
  %v1024 = vsub.s32 5, %v1023
  %v1025 = vrot.slane %v151, %v1024
  %v1026 = vmul.f32 %v1008, %v1013
  %v1027 = vmul.f32 %v1007, %v1017
  %v1028 = vmul.f32 %v1006, %v1021
  %v1029 = vmul.f32 %v1009, %v1025
  %1030 = vrot.lane.b32.xlu0 %v859, 113
  %v1031 = vpop.permute.xlu0 %1030
  %1032 = vrot.lane.b32.xlu0 %v860, 113
  %v1033 = vpop.permute.xlu0 %1032
  %1034 = vrot.lane.b32.xlu0 %v861, 113
  %v1035 = vpop.permute.xlu0 %1034
  %1036 = vrot.lane.b32.xlu0 %v862, 113
  %v1037 = vpop.permute.xlu0 %1036
  %vm1038 = vcmp.lt.s32.totalorder %v872, 113
  %v1039 = vsel %vm1038, %v1035, %v1037
  %v1040 = vsel %vm1038, %v1033, %v1035
  %v1041 = vsel %vm1038, %v1031, %v1033
  %v1042 = vsel %vm1038, %v1037, %v1031
  %v1043 = vlaneseq
  %v1044 = vshrl.u32 %v1043, 7
  %v1045 = vsub.s32 6, %v1044
  %v1046 = vrot.slane %v148, %v1045
  %v1047 = vlaneseq
  %v1048 = vshrl.u32 %v1047, 7
  %v1049 = vsub.s32 6, %v1048
  %v1050 = vrot.slane %v149, %v1049
  %v1051 = vlaneseq
  %v1052 = vshrl.u32 %v1051, 7
  %v1053 = vsub.s32 6, %v1052
  %v1054 = vrot.slane %v150, %v1053
  %v1055 = vlaneseq
  %v1056 = vshrl.u32 %v1055, 7
  %v1057 = vsub.s32 6, %v1056
  %v1058 = vrot.slane %v151, %v1057
  %v1059 = vmul.f32 %v1041, %v1046
  %v1060 = vmul.f32 %v1040, %v1050
  %v1061 = vmul.f32 %v1039, %v1054
  %v1062 = vmul.f32 %v1042, %v1058
  %1063 = vrot.lane.b32.xlu0 %v859, 112
  %v1064 = vpop.permute.xlu0 %1063
  %1065 = vrot.lane.b32.xlu0 %v860, 112
  %v1066 = vpop.permute.xlu0 %1065
  %1067 = vrot.lane.b32.xlu0 %v861, 112
  %v1068 = vpop.permute.xlu0 %1067
  %1069 = vrot.lane.b32.xlu0 %v862, 112
  %v1070 = vpop.permute.xlu0 %1069
  %vm1071 = vcmp.lt.s32.totalorder %v872, 112
  %v1072 = vsel %vm1071, %v1068, %v1070
  %v1073 = vsel %vm1071, %v1066, %v1068
  %v1074 = vsel %vm1071, %v1064, %v1066
  %v1075 = vsel %vm1071, %v1070, %v1064
  %v1076 = vlaneseq
  %v1077 = vshrl.u32 %v1076, 7
  %v1078 = vsub.s32 7, %v1077
  %v1079 = vrot.slane %v148, %v1078
  %v1080 = vlaneseq
  %v1081 = vshrl.u32 %v1080, 7
  %v1082 = vsub.s32 7, %v1081
  %v1083 = vrot.slane %v149, %v1082
  %v1084 = vlaneseq
  %v1085 = vshrl.u32 %v1084, 7
  %v1086 = vsub.s32 7, %v1085
  %v1087 = vrot.slane %v150, %v1086
  %v1088 = vlaneseq
  %v1089 = vshrl.u32 %v1088, 7
  %v1090 = vsub.s32 7, %v1089
  %v1091 = vrot.slane %v151, %v1090
  %v1092 = vmul.f32 %v1074, %v1079
  %v1093 = vmul.f32 %v1073, %v1083
  %v1094 = vmul.f32 %v1072, %v1087
  %v1095 = vmul.f32 %v1075, %v1091
  %1096 = vrot.lane.b32.xlu0 %v859, 111
  %v1097 = vpop.permute.xlu0 %1096
  %1098 = vrot.lane.b32.xlu0 %v860, 111
  %v1099 = vpop.permute.xlu0 %1098
  %1100 = vrot.lane.b32.xlu0 %v861, 111
  %v1101 = vpop.permute.xlu0 %1100
  %1102 = vrot.lane.b32.xlu0 %v862, 111
  %v1103 = vpop.permute.xlu0 %1102
  %vm1104 = vcmp.lt.s32.totalorder %v872, 111
  %v1105 = vsel %vm1104, %v1101, %v1103
  %v1106 = vsel %vm1104, %v1099, %v1101
  %v1107 = vsel %vm1104, %v1097, %v1099
  %v1108 = vsel %vm1104, %v1103, %v1097
  %v1109 = vlaneseq
  %v1110 = vshrl.u32 %v1109, 7
  %v1111 = vsub.s32 0, %v1110
  %v1112 = vrot.slane %v152, %v1111
  %v1113 = vlaneseq
  %v1114 = vshrl.u32 %v1113, 7
  %v1115 = vsub.s32 0, %v1114
  %v1116 = vrot.slane %v153, %v1115
  %v1117 = vlaneseq
  %v1118 = vshrl.u32 %v1117, 7
  %v1119 = vsub.s32 0, %v1118
  %v1120 = vrot.slane %v154, %v1119
  %v1121 = vlaneseq
  %v1122 = vshrl.u32 %v1121, 7
  %v1123 = vsub.s32 0, %v1122
  %v1124 = vrot.slane %v155, %v1123
  %v1125 = vmul.f32 %v1107, %v1112
  %v1126 = vmul.f32 %v1106, %v1116
  %v1127 = vmul.f32 %v1105, %v1120
  %v1128 = vmul.f32 %v1108, %v1124
  %v1129 = vpack.c.bf16 %v927, %v894
  %v1130 = vpack.c.bf16 %v928, %v895
  %v1131 = vpack.c.bf16 %v929, %v896
  %v1132 = vpack.c.bf16 %v930, %v897
  %v1133 = vpack.c.bf16 %v993, %v960
  %v1134 = vpack.c.bf16 %v994, %v961
  %v1135 = vpack.c.bf16 %v995, %v962
  %v1136 = vpack.c.bf16 %v996, %v963
  %v1137 = vpack.c.bf16 %v1026, %v859
  %v1138 = vpack.c.bf16 %v1027, %v860
  %v1139 = vpack.c.bf16 %v1028, %v861
  %v1140 = vpack.c.bf16 %v1029, %v862
  %v1141 = vpack.c.bf16 %v1092, %v1059
  %v1142 = vpack.c.bf16 %v1093, %v1060
  %v1143 = vpack.c.bf16 %v1094, %v1061
  %v1144 = vpack.c.bf16 %v1095, %v1062
  %v1145 = vpack.c.bf16 %v1125, %v1125
  %v1146 = vpack.c.bf16 %v1126, %v1126
  %v1147 = vpack.c.bf16 %v1127, %v1127
  %v1148 = vpack.c.bf16 %v1128, %v1128
  %1150 = vset.pattern.permute.xlu0 0
  %1151 = vperm.xlu0 %1150, %v145
  %v1152 = vpop.permute.xlu0 %1151
  %vm1154 = vcmask 588800
  %v1156 = vsel %vm1154, %v144, 0
  %vm1158 = vcmask 1043456
  %v1160 = vsel %vm1158, %v1145, 0
  %v1163 = vsel %vm1158, %v1146, 0
  %v1166 = vsel %vm1158, %v1147, 0
  %v1169 = vsel %vm1158, %v1148, 0
  %1171 = vmatprep.subr.bf16.mxu0 %v1130
  %1172 = vmatpush1.bf16.msra.mxu0 %v1129
  %1173 = vmatprep.subr.bf16.mxu0 %v1134
  %1174 = vmatpush1.bf16.msra.mxu0 %v1133
  %1175 = vmatprep.subr.bf16.mxu0 %v1138
  %1176 = vmatpush1.bf16.msra.mxu0 %v1137
  %1177 = vmatprep.subr.bf16.mxu0 %v1142
  %1178 = vmatpush1.bf16.msra.mxu0 %v1141
  %1179 = vmatprep.subr.bf16.mxu0 %v1163
  %1180 = vmatpush1.bf16.msra.mxu0 %v1160
  %1181 = vmatprep.subr.bf16.mxu0 0
  %1182 = vmatpush1.bf16.msra.mxu0 0
  %1183 = vmatprep.subr.bf16.mxu0 0
  %1184 = vmatpush1.bf16.msra.mxu0 0
  %1185 = vmatprep.subr.bf16.mxu0 0
  %1186 = vmatpush1.bf16.msra.mxu0 0
  %1187 = vmatprep.subr.bf16.mxu0 0
  %1188 = vmatpush1.bf16.msra.mxu0 0
  %1189 = vmatprep.subr.bf16.mxu0 0
  %1190 = vmatpush1.bf16.msra.mxu0 0
  %1191 = vmatprep.subr.bf16.mxu0 0
  %1192 = vmatpush1.bf16.msra.mxu0 0
  %1193 = vmatprep.subr.bf16.mxu0 0
  %1194 = vmatpush1.bf16.msra.mxu0 0
  %1195 = vmatprep.subr.bf16.mxu0 0
  %1196 = vmatpush1.bf16.msra.mxu0 0
  %1197 = vmatprep.subr.bf16.mxu0 0
  %1198 = vmatpush1.bf16.msra.mxu0 0
  %1199 = vmatprep.subr.bf16.mxu0 0
  %1200 = vmatpush1.bf16.msra.mxu0 0
  %1201 = vmatprep.subr.bf16.mxu0 0
  %1202 = vmatpush1.bf16.msra.mxu0 0
  %1203 = vmatprep.mubr.bf16.mxu0 0
  %1204 = vmatmul.mubr.bf16.gmra.mrb[0].mxu0 %v1156
  %v1205 = vpop.f32.mrb[0].mxu0
  %v1206 = vadd.f32 %v1152, %v1205
  %v1207 = vpop.f32.mrb[0].mxu0
  %v1208 = vadd.f32 %v1152, %v1207
  %v1209 = vpop.f32.mrb[0].mxu0
  %v1210 = vpop.f32.mrb[0].mxu0
  %1211 = vdwg.mxu0
  %1212 = vmatprep.subr.bf16.mxu0 %v1132
  %1213 = vmatpush1.bf16.msra.mxu0 %v1131
  %1214 = vmatprep.subr.bf16.mxu0 %v1136
  %1215 = vmatpush1.bf16.msra.mxu0 %v1135
  %1216 = vmatprep.subr.bf16.mxu0 %v1140
  %1217 = vmatpush1.bf16.msra.mxu0 %v1139
  %1218 = vmatprep.subr.bf16.mxu0 %v1144
  %1219 = vmatpush1.bf16.msra.mxu0 %v1143
  %1220 = vmatprep.subr.bf16.mxu0 %v1169
  %1221 = vmatpush1.bf16.msra.mxu0 %v1166
  %1222 = vmatprep.subr.bf16.mxu0 0
  %1223 = vmatpush1.bf16.msra.mxu0 0
  %1224 = vmatprep.subr.bf16.mxu0 0
  %1225 = vmatpush1.bf16.msra.mxu0 0
  %1226 = vmatprep.subr.bf16.mxu0 0
  %1227 = vmatpush1.bf16.msra.mxu0 0
  %1228 = vmatprep.subr.bf16.mxu0 0
  %1229 = vmatpush1.bf16.msra.mxu0 0
  %1230 = vmatprep.subr.bf16.mxu0 0
  %1231 = vmatpush1.bf16.msra.mxu0 0
  %1232 = vmatprep.subr.bf16.mxu0 0
  %1233 = vmatpush1.bf16.msra.mxu0 0
  %1234 = vmatprep.subr.bf16.mxu0 0
  %1235 = vmatpush1.bf16.msra.mxu0 0
  %1236 = vmatprep.subr.bf16.mxu0 0
  %1237 = vmatpush1.bf16.msra.mxu0 0
  %1238 = vmatprep.subr.bf16.mxu0 0
  %1239 = vmatpush1.bf16.msra.mxu0 0
  %1240 = vmatprep.subr.bf16.mxu0 0
  %1241 = vmatpush1.bf16.msra.mxu0 0
  %1242 = vmatprep.subr.bf16.mxu0 0
  %1243 = vmatpush1.bf16.msra.mxu0 0
  %1244 = vmatprep.mubr.bf16.mxu0 0
  %1245 = vmatmul.mubr.bf16.gmra.mrb[0].mxu0 %v1156
  %v1246 = vpop.f32.mrb[0].mxu0
  %v1247 = vadd.f32 %v1152, %v1246
  %v1248 = vpop.f32.mrb[0].mxu0
  %v1249 = vadd.f32 %v1152, %v1248
  %v1250 = vpop.f32.mrb[0].mxu0
  %v1251 = vpop.f32.mrb[0].mxu0
  %1252 = vdwg.mxu0
  %v1253 = vpack.c.bf16 %v1206, %v1206
  %v1254 = vpack.c.bf16 %v1208, %v1208
  %v1255 = vpack.c.bf16 %v1247, %v1247
  %v1256 = vpack.c.bf16 %v1249, %v1249
  %v1321 = vunpack.c.l.b16 %v158
  %v1322 = vunpack.c.l.b16 %v159
  %v1323 = vunpack.c.l.b16 %v160
  %v1324 = vunpack.c.l.b16 %v161
  %v1325 = vunpack.c.l.b16 %v162
  %v1326 = vunpack.c.l.b16 %v163
  %v1327 = vunpack.c.l.b16 %v164
  %v1328 = vunpack.c.l.b16 %v165
  %v1329 = vunpack.c.l.b16 %v166
  %v1330 = vunpack.c.l.b16 %v167
  %v1331 = vunpack.c.l.b16 %v168
  %v1332 = vunpack.c.l.b16 %v169
  %v1333 = vunpack.c.l.b16 %v170
  %v1334 = vunpack.c.l.b16 %v171
  %v1335 = vunpack.c.l.b16 %v172
  %v1336 = vunpack.c.l.b16 %v173
  %v1337 = vunpack.c.l.b16 %v174
  %v1338 = vunpack.c.l.b16 %v175
  %v1339 = vunpack.c.l.b16 %v176
  %v1340 = vunpack.c.l.b16 %v177
  %v1341 = vunpack.c.l.b16 %v178
  %v1342 = vunpack.c.l.b16 %v179
  %v1343 = vunpack.c.l.b16 %v180
  %v1344 = vunpack.c.l.b16 %v181
  %v1345 = vunpack.c.l.b16 %v182
  %v1346 = vunpack.c.l.b16 %v183
  %v1347 = vunpack.c.l.b16 %v184
  %v1348 = vunpack.c.l.b16 %v185
  %v1349 = vunpack.c.l.b16 %v186
  %v1350 = vunpack.c.l.b16 %v187
  %v1351 = vunpack.c.l.b16 %v188
  %v1352 = vunpack.c.l.b16 %v189
  %v1353 = vunpack.c.l.b16 %v190
  %v1354 = vunpack.c.l.b16 %v191
  %v1355 = vunpack.c.l.b16 %v192
  %v1356 = vunpack.c.l.b16 %v193
  %v1357 = vunpack.c.l.b16 %v194
  %v1358 = vunpack.c.l.b16 %v195
  %v1359 = vunpack.c.l.b16 %v196
  %v1360 = vunpack.c.l.b16 %v197
  %v1361 = vunpack.c.l.b16 %v198
  %v1362 = vunpack.c.l.b16 %v199
  %v1363 = vunpack.c.l.b16 %v200
  %v1364 = vunpack.c.l.b16 %v201
  %v1365 = vunpack.c.l.b16 %v202
  %v1366 = vunpack.c.l.b16 %v203
  %v1367 = vunpack.c.l.b16 %v204
  %v1368 = vunpack.c.l.b16 %v205
  %v1369 = vunpack.c.l.b16 %v206
  %v1370 = vunpack.c.l.b16 %v207
  %v1371 = vunpack.c.l.b16 %v208
  %v1372 = vunpack.c.l.b16 %v209
  %v1373 = vunpack.c.l.b16 %v210
  %v1374 = vunpack.c.l.b16 %v211
  %v1375 = vunpack.c.l.b16 %v212
  %v1376 = vunpack.c.l.b16 %v213
  %v1377 = vunpack.c.l.b16 %v214
  %v1378 = vunpack.c.l.b16 %v215
  %v1379 = vunpack.c.l.b16 %v216
  %v1380 = vunpack.c.l.b16 %v217
  %v1381 = vunpack.c.l.b16 %v218
  %v1382 = vunpack.c.l.b16 %v219
  %v1383 = vunpack.c.l.b16 %v220
  %v1384 = vunpack.c.l.b16 %v221
  %v1385 = vpack.c.b16 %v1322, %v1321
  %v1386 = vpack.c.b16 %v1324, %v1323
  %v1387 = vpack.c.b16 %v1326, %v1325
  %v1388 = vpack.c.b16 %v1328, %v1327
  %v1389 = vpack.c.b16 %v1330, %v1329
  %v1390 = vpack.c.b16 %v1332, %v1331
  %v1391 = vpack.c.b16 %v1334, %v1333
  %v1392 = vpack.c.b16 %v1336, %v1335
  %v1393 = vpack.c.b16 %v1338, %v1337
  %v1394 = vpack.c.b16 %v1340, %v1339
  %v1395 = vpack.c.b16 %v1342, %v1341
  %v1396 = vpack.c.b16 %v1344, %v1343
  %v1397 = vpack.c.b16 %v1346, %v1345
  %v1398 = vpack.c.b16 %v1348, %v1347
  %v1399 = vpack.c.b16 %v1350, %v1349
  %v1400 = vpack.c.b16 %v1352, %v1351
  %v1401 = vpack.c.b16 %v1354, %v1353
  %v1402 = vpack.c.b16 %v1356, %v1355
  %v1403 = vpack.c.b16 %v1358, %v1357
  %v1404 = vpack.c.b16 %v1360, %v1359
  %v1405 = vpack.c.b16 %v1362, %v1361
  %v1406 = vpack.c.b16 %v1364, %v1363
  %v1407 = vpack.c.b16 %v1366, %v1365
  %v1408 = vpack.c.b16 %v1368, %v1367
  %v1409 = vpack.c.b16 %v1370, %v1369
  %v1410 = vpack.c.b16 %v1372, %v1371
  %v1411 = vpack.c.b16 %v1374, %v1373
  %v1412 = vpack.c.b16 %v1376, %v1375
  %v1413 = vpack.c.b16 %v1378, %v1377
  %v1414 = vpack.c.b16 %v1380, %v1379
  %v1415 = vpack.c.b16 %v1382, %v1381
  %v1416 = vpack.c.b16 %v1384, %v1383
  %1449 = vmatprep.subr.bf16.mxu0 0
  %1450 = vmatpush1.bf16.msra.mxu0 %v1385
  %1451 = vmatprep.subr.bf16.mxu0 0
  %1452 = vmatpush1.bf16.msra.mxu0 %v1386
  %1453 = vmatprep.subr.bf16.mxu0 0
  %1454 = vmatpush1.bf16.msra.mxu0 %v1387
  %1455 = vmatprep.subr.bf16.mxu0 0
  %1456 = vmatpush1.bf16.msra.mxu0 %v1388
  %1457 = vmatprep.subr.bf16.mxu0 0
  %1458 = vmatpush1.bf16.msra.mxu0 %v1389
  %1459 = vmatprep.subr.bf16.mxu0 0
  %1460 = vmatpush1.bf16.msra.mxu0 %v1390
  %1461 = vmatprep.subr.bf16.mxu0 0
  %1462 = vmatpush1.bf16.msra.mxu0 %v1391
  %1463 = vmatprep.subr.bf16.mxu0 0
  %1464 = vmatpush1.bf16.msra.mxu0 %v1392
  %1465 = vmatprep.subr.bf16.mxu0 0
  %1466 = vmatpush1.bf16.msra.mxu0 %v1393
  %1467 = vmatprep.subr.bf16.mxu0 0
  %1468 = vmatpush1.bf16.msra.mxu0 %v1394
  %1469 = vmatprep.subr.bf16.mxu0 0
  %1470 = vmatpush1.bf16.msra.mxu0 %v1395
  %1471 = vmatprep.subr.bf16.mxu0 0
  %1472 = vmatpush1.bf16.msra.mxu0 %v1396
  %1473 = vmatprep.subr.bf16.mxu0 0
  %1474 = vmatpush1.bf16.msra.mxu0 %v1397
  %1475 = vmatprep.subr.bf16.mxu0 0
  %1476 = vmatpush1.bf16.msra.mxu0 %v1398
  %1477 = vmatprep.subr.bf16.mxu0 0
  %1478 = vmatpush1.bf16.msra.mxu0 %v1399
  %1479 = vmatprep.subr.bf16.mxu0 0
  %1480 = vmatpush1.bf16.msra.mxu0 %v1400
  %1481 = vmatprep.mubr.bf16.mxu0 %v1254
  %1482 = vmatmul.mubr.bf16.gmra.mrb[0].mxu0 %v1253
  %v1483 = vpop.f32.mrb[0].mxu0
  %v1484 = vadd.f32 0.0, %v1483
  %v1485 = vpop.f32.mrb[0].mxu0
  %v1486 = vpop.f32.mrb[0].mxu0
  %v1487 = vpop.f32.mrb[0].mxu0
  %1488 = vdwg.mxu0
  %1489 = vmatprep.subr.bf16.mxu0 0
  %1490 = vmatpush1.bf16.msra.mxu0 %v1401
  %1491 = vmatprep.subr.bf16.mxu0 0
  %1492 = vmatpush1.bf16.msra.mxu0 %v1402
  %1493 = vmatprep.subr.bf16.mxu0 0
  %1494 = vmatpush1.bf16.msra.mxu0 %v1403
  %1495 = vmatprep.subr.bf16.mxu0 0
  %1496 = vmatpush1.bf16.msra.mxu0 %v1404
  %1497 = vmatprep.subr.bf16.mxu0 0
  %1498 = vmatpush1.bf16.msra.mxu0 %v1405
  %1499 = vmatprep.subr.bf16.mxu0 0
  %1500 = vmatpush1.bf16.msra.mxu0 %v1406
  %1501 = vmatprep.subr.bf16.mxu0 0
  %1502 = vmatpush1.bf16.msra.mxu0 %v1407
  %1503 = vmatprep.subr.bf16.mxu0 0
  %1504 = vmatpush1.bf16.msra.mxu0 %v1408
  %1505 = vmatprep.subr.bf16.mxu0 0
  %1506 = vmatpush1.bf16.msra.mxu0 %v1409
  %1507 = vmatprep.subr.bf16.mxu0 0
  %1508 = vmatpush1.bf16.msra.mxu0 %v1410
  %1509 = vmatprep.subr.bf16.mxu0 0
  %1510 = vmatpush1.bf16.msra.mxu0 %v1411
  %1511 = vmatprep.subr.bf16.mxu0 0
  %1512 = vmatpush1.bf16.msra.mxu0 %v1412
  %1513 = vmatprep.subr.bf16.mxu0 0
  %1514 = vmatpush1.bf16.msra.mxu0 %v1413
  %1515 = vmatprep.subr.bf16.mxu0 0
  %1516 = vmatpush1.bf16.msra.mxu0 %v1414
  %1517 = vmatprep.subr.bf16.mxu0 0
  %1518 = vmatpush1.bf16.msra.mxu0 %v1415
  %1519 = vmatprep.subr.bf16.mxu0 0
  %1520 = vmatpush1.bf16.msra.mxu0 %v1416
  %1521 = vmatprep.mubr.bf16.mxu0 %v1256
  %1522 = vmatmul.mubr.bf16.gmra.mrb[0].mxu0 %v1255
  %v1523 = vpop.f32.mrb[0].mxu0
  %v1524 = vadd.f32 %v1484, %v1523
  %v1525 = vpop.f32.mrb[0].mxu0
  %v1526 = vpop.f32.mrb[0].mxu0
  %v1527 = vpop.f32.mrb[0].mxu0
  %1528 = vdwg.mxu0
  %v1529 = vpack.c.bf16 %v54, %v54
  %v1530 = vpack.c.bf16 %v55, %v55
  %v1531 = vpack.c.bf16 %v56, %v56
  %v1532 = vpack.c.bf16 %v57, %v57
  %1533 = vmatprep.subr.bf16.mxu0 0
  %1534 = vmatpush1.bf16.msra.mxu0 %v1385
  %1535 = vmatprep.subr.bf16.mxu0 0
  %1536 = vmatpush1.bf16.msra.mxu0 %v1386
  %1537 = vmatprep.subr.bf16.mxu0 0
  %1538 = vmatpush1.bf16.msra.mxu0 %v1387
  %1539 = vmatprep.subr.bf16.mxu0 0
  %1540 = vmatpush1.bf16.msra.mxu0 %v1388
  %1541 = vmatprep.subr.bf16.mxu0 0
  %1542 = vmatpush1.bf16.msra.mxu0 %v1389
  %1543 = vmatprep.subr.bf16.mxu0 0
  %1544 = vmatpush1.bf16.msra.mxu0 %v1390
  %1545 = vmatprep.subr.bf16.mxu0 0
  %1546 = vmatpush1.bf16.msra.mxu0 %v1391
  %1547 = vmatprep.subr.bf16.mxu0 0
  %1548 = vmatpush1.bf16.msra.mxu0 %v1392
  %1549 = vmatprep.subr.bf16.mxu0 0
  %1550 = vmatpush1.bf16.msra.mxu0 %v1393
  %1551 = vmatprep.subr.bf16.mxu0 0
  %1552 = vmatpush1.bf16.msra.mxu0 %v1394
  %1553 = vmatprep.subr.bf16.mxu0 0
  %1554 = vmatpush1.bf16.msra.mxu0 %v1395
  %1555 = vmatprep.subr.bf16.mxu0 0
  %1556 = vmatpush1.bf16.msra.mxu0 %v1396
  %1557 = vmatprep.subr.bf16.mxu0 0
  %1558 = vmatpush1.bf16.msra.mxu0 %v1397
  %1559 = vmatprep.subr.bf16.mxu0 0
  %1560 = vmatpush1.bf16.msra.mxu0 %v1398
  %1561 = vmatprep.subr.bf16.mxu0 0
  %1562 = vmatpush1.bf16.msra.mxu0 %v1399
  %1563 = vmatprep.subr.bf16.mxu0 0
  %1564 = vmatpush1.bf16.msra.mxu0 %v1400
  %1565 = vmatprep.mubr.bf16.mxu0 %v1530
  %1566 = vmatmul.mubr.bf16.gmra.mrb[0].mxu0 %v1529
  %v1567 = vpop.f32.mrb[0].mxu0
  %v1568 = vadd.f32 0.0, %v1567
  %v1569 = vpop.f32.mrb[0].mxu0
  %v1570 = vpop.f32.mrb[0].mxu0
  %v1571 = vpop.f32.mrb[0].mxu0
  %1572 = vdwg.mxu0
  %1573 = vmatprep.subr.bf16.mxu0 0
  %1574 = vmatpush1.bf16.msra.mxu0 %v1401
  %1575 = vmatprep.subr.bf16.mxu0 0
  %1576 = vmatpush1.bf16.msra.mxu0 %v1402
  %1577 = vmatprep.subr.bf16.mxu0 0
  %1578 = vmatpush1.bf16.msra.mxu0 %v1403
  %1579 = vmatprep.subr.bf16.mxu0 0
  %1580 = vmatpush1.bf16.msra.mxu0 %v1404
  %1581 = vmatprep.subr.bf16.mxu0 0
  %1582 = vmatpush1.bf16.msra.mxu0 %v1405
  %1583 = vmatprep.subr.bf16.mxu0 0
  %1584 = vmatpush1.bf16.msra.mxu0 %v1406
  %1585 = vmatprep.subr.bf16.mxu0 0
  %1586 = vmatpush1.bf16.msra.mxu0 %v1407
  %1587 = vmatprep.subr.bf16.mxu0 0
  %1588 = vmatpush1.bf16.msra.mxu0 %v1408
  %1589 = vmatprep.subr.bf16.mxu0 0
  %1590 = vmatpush1.bf16.msra.mxu0 %v1409
  %1591 = vmatprep.subr.bf16.mxu0 0
  %1592 = vmatpush1.bf16.msra.mxu0 %v1410
  %1593 = vmatprep.subr.bf16.mxu0 0
  %1594 = vmatpush1.bf16.msra.mxu0 %v1411
  %1595 = vmatprep.subr.bf16.mxu0 0
  %1596 = vmatpush1.bf16.msra.mxu0 %v1412
  %1597 = vmatprep.subr.bf16.mxu0 0
  %1598 = vmatpush1.bf16.msra.mxu0 %v1413
  %1599 = vmatprep.subr.bf16.mxu0 0
  %1600 = vmatpush1.bf16.msra.mxu0 %v1414
  %1601 = vmatprep.subr.bf16.mxu0 0
  %1602 = vmatpush1.bf16.msra.mxu0 %v1415
  %1603 = vmatprep.subr.bf16.mxu0 0
  %1604 = vmatpush1.bf16.msra.mxu0 %v1416
  %1605 = vmatprep.mubr.bf16.mxu0 %v1532
  %1606 = vmatmul.mubr.bf16.gmra.mrb[0].mxu0 %v1531
  %v1607 = vpop.f32.mrb[0].mxu0
  %v1608 = vadd.f32 %v1568, %v1607
  %v1609 = vpop.f32.mrb[0].mxu0
  %v1610 = vpop.f32.mrb[0].mxu0
  %v1611 = vpop.f32.mrb[0].mxu0
  %1612 = vdwg.mxu0
  %1613 = vmatprep.subr.mxu0 0.0
  %1614 = vmatpush1.msra.mxu0 %v127
  %1615 = vmatprep.subr.mxu0 0.0
  %1616 = vmatpush1.msra.mxu0 %v128
  %1617 = vmatprep.subr.mxu0 0.0
  %1618 = vmatpush1.msra.mxu0 %v129
  %1619 = vmatprep.subr.mxu0 0.0
  %1620 = vmatpush1.msra.mxu0 %v130
  %1621 = vmatprep.subr.mxu0 0.0
  %1622 = vmatpush1.msra.mxu0 %v131
  %1623 = vmatprep.subr.mxu0 0.0
  %1624 = vmatpush1.msra.mxu0 %v132
  %1625 = vmatprep.subr.mxu0 0.0
  %1626 = vmatpush1.msra.mxu0 %v133
  %1627 = vmatprep.subr.mxu0 0.0
  %1628 = vmatpush1.msra.mxu0 %v134
  %1629 = vmatprep.subr.mxu0 0.0
  %1630 = vmatpush1.msra.mxu0 %v135
  %1631 = vmatprep.subr.mxu0 0.0
  %1632 = vmatpush1.msra.mxu0 %v136
  %1633 = vmatprep.subr.mxu0 0.0
  %1634 = vmatpush1.msra.mxu0 %v137
  %1635 = vmatprep.subr.mxu0 0.0
  %1636 = vmatpush1.msra.mxu0 %v138
  %1637 = vmatprep.subr.mxu0 0.0
  %1638 = vmatpush1.msra.mxu0 %v139
  %1639 = vmatprep.subr.mxu0 0.0
  %1640 = vmatpush1.msra.mxu0 %v140
  %1641 = vmatprep.subr.mxu0 0.0
  %1642 = vmatpush1.msra.mxu0 %v141
  %1643 = vmatprep.subr.mxu0 0.0
  %1644 = vmatpush1.msra.mxu0 %v142
  %1645 = vmatprep.subr.mxu0 0.0
  %1646 = vmatpush1.msra.mxu0 0.0
  %1647 = vmatprep.subr.mxu0 0.0
  %1648 = vmatpush1.msra.mxu0 0.0
  %1649 = vmatprep.subr.mxu0 0.0
  %1650 = vmatpush1.msra.mxu0 0.0
  %1651 = vmatprep.subr.mxu0 0.0
  %1652 = vmatpush1.msra.mxu0 0.0
  %1653 = vmatprep.subr.mxu0 0.0
  %1654 = vmatpush1.msra.mxu0 0.0
  %1655 = vmatprep.subr.mxu0 0.0
  %1656 = vmatpush1.msra.mxu0 0.0
  %1657 = vmatprep.subr.mxu0 0.0
  %1658 = vmatpush1.msra.mxu0 0.0
  %1659 = vmatprep.subr.mxu0 0.0
  %1660 = vmatpush1.msra.mxu0 0.0
  %1661 = vmatprep.subr.mxu0 0.0
  %1662 = vmatpush1.msra.mxu0 0.0
  %1663 = vmatprep.subr.mxu0 0.0
  %1664 = vmatpush1.msra.mxu0 0.0
  %1665 = vmatprep.subr.mxu0 0.0
  %1666 = vmatpush1.msra.mxu0 0.0
  %1667 = vmatprep.subr.mxu0 0.0
  %1668 = vmatpush1.msra.mxu0 0.0
  %1669 = vmatprep.subr.mxu0 0.0
  %1670 = vmatpush1.msra.mxu0 0.0
  %1671 = vmatprep.subr.mxu0 0.0
  %1672 = vmatpush1.msra.mxu0 0.0
  %1673 = vmatprep.subr.mxu0 0.0
  %1674 = vmatpush1.msra.mxu0 0.0
  %1675 = vmatprep.subr.mxu0 0.0
  %1676 = vmatpush1.msra.mxu0 0.0
  %1677 = vmatprep.mubr.f32.mxu0 0.0
  %1678 = vmatmul.mubr.f32.gmra.mrb[0].mxu0 %v1524
  %v1679 = vpop.f32.mrb[0].mxu0
  %v1680 = vadd.f32 0.0, %v1679
  %v1681 = vpop.f32.mrb[0].mxu0
  %1682 = vdwg.mxu0
  %v1684 = vsel %vm380, %v1680, 0
  %v1687 = vsel %vm384, %v143, 0
  %1689 = vmatprep.subr.mxu0 0.0
  %1690 = vmatpush1.msra.mxu0 %v1687
  %1691 = vmatprep.subr.mxu0 0.0
  %1692 = vmatpush1.msra.mxu0 0.0
  %1693 = vmatprep.subr.mxu0 0.0
  %1694 = vmatpush1.msra.mxu0 0.0
  %1695 = vmatprep.subr.mxu0 0.0
  %1696 = vmatpush1.msra.mxu0 0.0
  %1697 = vmatprep.subr.mxu0 0.0
  %1698 = vmatpush1.msra.mxu0 0.0
  %1699 = vmatprep.subr.mxu0 0.0
  %1700 = vmatpush1.msra.mxu0 0.0
  %1701 = vmatprep.subr.mxu0 0.0
  %1702 = vmatpush1.msra.mxu0 0.0
  %1703 = vmatprep.subr.mxu0 0.0
  %1704 = vmatpush1.msra.mxu0 0.0
  %1705 = vmatprep.subr.mxu0 0.0
  %1706 = vmatpush1.msra.mxu0 0.0
  %1707 = vmatprep.subr.mxu0 0.0
  %1708 = vmatpush1.msra.mxu0 0.0
  %1709 = vmatprep.subr.mxu0 0.0
  %1710 = vmatpush1.msra.mxu0 0.0
  %1711 = vmatprep.subr.mxu0 0.0
  %1712 = vmatpush1.msra.mxu0 0.0
  %1713 = vmatprep.subr.mxu0 0.0
  %1714 = vmatpush1.msra.mxu0 0.0
  %1715 = vmatprep.subr.mxu0 0.0
  %1716 = vmatpush1.msra.mxu0 0.0
  %1717 = vmatprep.subr.mxu0 0.0
  %1718 = vmatpush1.msra.mxu0 0.0
  %1719 = vmatprep.subr.mxu0 0.0
  %1720 = vmatpush1.msra.mxu0 0.0
  %1721 = vmatprep.subr.mxu0 0.0
  %1722 = vmatpush1.msra.mxu0 0.0
  %1723 = vmatprep.subr.mxu0 0.0
  %1724 = vmatpush1.msra.mxu0 0.0
  %1725 = vmatprep.subr.mxu0 0.0
  %1726 = vmatpush1.msra.mxu0 0.0
  %1727 = vmatprep.subr.mxu0 0.0
  %1728 = vmatpush1.msra.mxu0 0.0
  %1729 = vmatprep.subr.mxu0 0.0
  %1730 = vmatpush1.msra.mxu0 0.0
  %1731 = vmatprep.subr.mxu0 0.0
  %1732 = vmatpush1.msra.mxu0 0.0
  %1733 = vmatprep.subr.mxu0 0.0
  %1734 = vmatpush1.msra.mxu0 0.0
  %1735 = vmatprep.subr.mxu0 0.0
  %1736 = vmatpush1.msra.mxu0 0.0
  %1737 = vmatprep.subr.mxu0 0.0
  %1738 = vmatpush1.msra.mxu0 0.0
  %1739 = vmatprep.subr.mxu0 0.0
  %1740 = vmatpush1.msra.mxu0 0.0
  %1741 = vmatprep.subr.mxu0 0.0
  %1742 = vmatpush1.msra.mxu0 0.0
  %1743 = vmatprep.subr.mxu0 0.0
  %1744 = vmatpush1.msra.mxu0 0.0
  %1745 = vmatprep.subr.mxu0 0.0
  %1746 = vmatpush1.msra.mxu0 0.0
  %1747 = vmatprep.subr.mxu0 0.0
  %1748 = vmatpush1.msra.mxu0 0.0
  %1749 = vmatprep.subr.mxu0 0.0
  %1750 = vmatpush1.msra.mxu0 0.0
  %1751 = vmatprep.subr.mxu0 0.0
  %1752 = vmatpush1.msra.mxu0 0.0
  %1753 = vmatprep.mubr.f32.mxu0 0.0
  %1754 = vmatmul.mubr.f32.gmra.mrb[0].mxu0 %v1684
  %v1755 = vpop.f32.mrb[0].mxu0
  %v1756 = vadd.f32 0.0, %v1755
  %v1757 = vpop.f32.mrb[0].mxu0
  %1758 = vdwg.mxu0
  %v1759 = vsub.f32 %v1524, %v1756
  %v1760 = vmul.f32 %v1759, %v1759
  %1761 = vmatprep.subr.mxu0 0.0
  %1762 = vmatpush1.msra.mxu0 %v127
  %1763 = vmatprep.subr.mxu0 0.0
  %1764 = vmatpush1.msra.mxu0 %v128
  %1765 = vmatprep.subr.mxu0 0.0
  %1766 = vmatpush1.msra.mxu0 %v129
  %1767 = vmatprep.subr.mxu0 0.0
  %1768 = vmatpush1.msra.mxu0 %v130
  %1769 = vmatprep.subr.mxu0 0.0
  %1770 = vmatpush1.msra.mxu0 %v131
  %1771 = vmatprep.subr.mxu0 0.0
  %1772 = vmatpush1.msra.mxu0 %v132
  %1773 = vmatprep.subr.mxu0 0.0
  %1774 = vmatpush1.msra.mxu0 %v133
  %1775 = vmatprep.subr.mxu0 0.0
  %1776 = vmatpush1.msra.mxu0 %v134
  %1777 = vmatprep.subr.mxu0 0.0
  %1778 = vmatpush1.msra.mxu0 %v135
  %1779 = vmatprep.subr.mxu0 0.0
  %1780 = vmatpush1.msra.mxu0 %v136
  %1781 = vmatprep.subr.mxu0 0.0
  %1782 = vmatpush1.msra.mxu0 %v137
  %1783 = vmatprep.subr.mxu0 0.0
  %1784 = vmatpush1.msra.mxu0 %v138
  %1785 = vmatprep.subr.mxu0 0.0
  %1786 = vmatpush1.msra.mxu0 %v139
  %1787 = vmatprep.subr.mxu0 0.0
  %1788 = vmatpush1.msra.mxu0 %v140
  %1789 = vmatprep.subr.mxu0 0.0
  %1790 = vmatpush1.msra.mxu0 %v141
  %1791 = vmatprep.subr.mxu0 0.0
  %1792 = vmatpush1.msra.mxu0 %v142
  %1793 = vmatprep.subr.mxu0 0.0
  %1794 = vmatpush1.msra.mxu0 0.0
  %1795 = vmatprep.subr.mxu0 0.0
  %1796 = vmatpush1.msra.mxu0 0.0
  %1797 = vmatprep.subr.mxu0 0.0
  %1798 = vmatpush1.msra.mxu0 0.0
  %1799 = vmatprep.subr.mxu0 0.0
  %1800 = vmatpush1.msra.mxu0 0.0
  %1801 = vmatprep.subr.mxu0 0.0
  %1802 = vmatpush1.msra.mxu0 0.0
  %1803 = vmatprep.subr.mxu0 0.0
  %1804 = vmatpush1.msra.mxu0 0.0
  %1805 = vmatprep.subr.mxu0 0.0
  %1806 = vmatpush1.msra.mxu0 0.0
  %1807 = vmatprep.subr.mxu0 0.0
  %1808 = vmatpush1.msra.mxu0 0.0
  %1809 = vmatprep.subr.mxu0 0.0
  %1810 = vmatpush1.msra.mxu0 0.0
  %1811 = vmatprep.subr.mxu0 0.0
  %1812 = vmatpush1.msra.mxu0 0.0
  %1813 = vmatprep.subr.mxu0 0.0
  %1814 = vmatpush1.msra.mxu0 0.0
  %1815 = vmatprep.subr.mxu0 0.0
  %1816 = vmatpush1.msra.mxu0 0.0
  %1817 = vmatprep.subr.mxu0 0.0
  %1818 = vmatpush1.msra.mxu0 0.0
  %1819 = vmatprep.subr.mxu0 0.0
  %1820 = vmatpush1.msra.mxu0 0.0
  %1821 = vmatprep.subr.mxu0 0.0
  %1822 = vmatpush1.msra.mxu0 0.0
  %1823 = vmatprep.subr.mxu0 0.0
  %1824 = vmatpush1.msra.mxu0 0.0
  %1825 = vmatprep.mubr.f32.mxu0 0.0
  %1826 = vmatmul.mubr.f32.gmra.mrb[0].mxu0 %v1760
  %v1827 = vpop.f32.mrb[0].mxu0
  %v1828 = vadd.f32 1e-05, %v1827
  %v1829 = vpop.f32.mrb[0].mxu0
  %1830 = vdwg.mxu0
  %v1831 = vrsqrt.pop %v1828
  %v1833 = vsel %vm380, %v1831, 0
  %1835 = vmatprep.subr.mxu0 0.0
  %1836 = vmatpush1.msra.mxu0 %v1687
  %1837 = vmatprep.subr.mxu0 0.0
  %1838 = vmatpush1.msra.mxu0 0.0
  %1839 = vmatprep.subr.mxu0 0.0
  %1840 = vmatpush1.msra.mxu0 0.0
  %1841 = vmatprep.subr.mxu0 0.0
  %1842 = vmatpush1.msra.mxu0 0.0
  %1843 = vmatprep.subr.mxu0 0.0
  %1844 = vmatpush1.msra.mxu0 0.0
  %1845 = vmatprep.subr.mxu0 0.0
  %1846 = vmatpush1.msra.mxu0 0.0
  %1847 = vmatprep.subr.mxu0 0.0
  %1848 = vmatpush1.msra.mxu0 0.0
  %1849 = vmatprep.subr.mxu0 0.0
  %1850 = vmatpush1.msra.mxu0 0.0
  %1851 = vmatprep.subr.mxu0 0.0
  %1852 = vmatpush1.msra.mxu0 0.0
  %1853 = vmatprep.subr.mxu0 0.0
  %1854 = vmatpush1.msra.mxu0 0.0
  %1855 = vmatprep.subr.mxu0 0.0
  %1856 = vmatpush1.msra.mxu0 0.0
  %1857 = vmatprep.subr.mxu0 0.0
  %1858 = vmatpush1.msra.mxu0 0.0
  %1859 = vmatprep.subr.mxu0 0.0
  %1860 = vmatpush1.msra.mxu0 0.0
  %1861 = vmatprep.subr.mxu0 0.0
  %1862 = vmatpush1.msra.mxu0 0.0
  %1863 = vmatprep.subr.mxu0 0.0
  %1864 = vmatpush1.msra.mxu0 0.0
  %1865 = vmatprep.subr.mxu0 0.0
  %1866 = vmatpush1.msra.mxu0 0.0
  %1867 = vmatprep.subr.mxu0 0.0
  %1868 = vmatpush1.msra.mxu0 0.0
  %1869 = vmatprep.subr.mxu0 0.0
  %1870 = vmatpush1.msra.mxu0 0.0
  %1871 = vmatprep.subr.mxu0 0.0
  %1872 = vmatpush1.msra.mxu0 0.0
  %1873 = vmatprep.subr.mxu0 0.0
  %1874 = vmatpush1.msra.mxu0 0.0
  %1875 = vmatprep.subr.mxu0 0.0
  %1876 = vmatpush1.msra.mxu0 0.0
  %1877 = vmatprep.subr.mxu0 0.0
  %1878 = vmatpush1.msra.mxu0 0.0
  %1879 = vmatprep.subr.mxu0 0.0
  %1880 = vmatpush1.msra.mxu0 0.0
  %1881 = vmatprep.subr.mxu0 0.0
  %1882 = vmatpush1.msra.mxu0 0.0
  %1883 = vmatprep.subr.mxu0 0.0
  %1884 = vmatpush1.msra.mxu0 0.0
  %1885 = vmatprep.subr.mxu0 0.0
  %1886 = vmatpush1.msra.mxu0 0.0
  %1887 = vmatprep.subr.mxu0 0.0
  %1888 = vmatpush1.msra.mxu0 0.0
  %1889 = vmatprep.subr.mxu0 0.0
  %1890 = vmatpush1.msra.mxu0 0.0
  %1891 = vmatprep.subr.mxu0 0.0
  %1892 = vmatpush1.msra.mxu0 0.0
  %1893 = vmatprep.subr.mxu0 0.0
  %1894 = vmatpush1.msra.mxu0 0.0
  %1895 = vmatprep.subr.mxu0 0.0
  %1896 = vmatpush1.msra.mxu0 0.0
  %1897 = vmatprep.subr.mxu0 0.0
  %1898 = vmatpush1.msra.mxu0 0.0
  %1899 = vmatprep.mubr.f32.mxu0 0.0
  %1900 = vmatmul.mubr.f32.gmra.mrb[0].mxu0 %v1833
  %v1901 = vpop.f32.mrb[0].mxu0
  %v1902 = vadd.f32 0.0, %v1901
  %v1903 = vpop.f32.mrb[0].mxu0
  %1904 = vdwg.mxu0
  %v1905 = vmul.f32 %v1759, %v1902
  %1907 = vset.pattern.permute.xlu0 0
  %1908 = vperm.xlu0 %1907, %v60
  %v1909 = vpop.permute.xlu0 %1908
  %v1911 = vmul.f32 %v1905, %v1909
  %1913 = vset.pattern.permute.xlu0 0
  %1914 = vperm.xlu0 %1913, %v61
  %v1915 = vpop.permute.xlu0 %1914
  %v1917 = vadd.f32 %v1911, %v1915
  %vm1918 = vcmp.ge.f32.partialorder %v1917, 0.0
  %v1919 = vmul.f32 %v1917, 0.2
  %v1920 = vsel %vm1918, %v1917, %v1919
  %1921 = vrot.lane.b32.xlu0 %v1920, 9
  %v1922 = vpop.permute.xlu0 %1921
  %v1923 = vlaneseq
  %v1924 = vshrl.u32 %v1923, 7
  %v1925 = vsub.s32 0, %v1924
  %v1926 = vrot.slane %v156, %v1925
  %v1927 = vmul.f32 %v1922, %v1926
  %1928 = vrot.lane.b32.xlu0 %v1920, 8
  %v1929 = vpop.permute.xlu0 %1928
  %v1930 = vlaneseq
  %v1931 = vshrl.u32 %v1930, 7
  %v1932 = vsub.s32 1, %v1931
  %v1933 = vrot.slane %v156, %v1932
  %v1934 = vmul.f32 %v1929, %v1933
  %1935 = vrot.lane.b32.xlu0 %v1920, 7
  %v1936 = vpop.permute.xlu0 %1935
  %v1937 = vlaneseq
  %v1938 = vshrl.u32 %v1937, 7
  %v1939 = vsub.s32 2, %v1938
  %v1940 = vrot.slane %v156, %v1939
  %v1941 = vmul.f32 %v1936, %v1940
  %1942 = vrot.lane.b32.xlu0 %v1920, 1
  %v1943 = vpop.permute.xlu0 %1942
  %v1944 = vlaneseq
  %v1945 = vshrl.u32 %v1944, 7
  %v1946 = vsub.s32 3, %v1945
  %v1947 = vrot.slane %v156, %v1946
  %v1948 = vmul.f32 %v1943, %v1947
  %1949 = vrot.lane.b32.xlu0 %v1920, 127
  %v1950 = vpop.permute.xlu0 %1949
  %v1951 = vlaneseq
  %v1952 = vshrl.u32 %v1951, 7
  %v1953 = vsub.s32 5, %v1952
  %v1954 = vrot.slane %v156, %v1953
  %v1955 = vmul.f32 %v1950, %v1954
  %1956 = vrot.lane.b32.xlu0 %v1920, 121
  %v1957 = vpop.permute.xlu0 %1956
  %v1958 = vlaneseq
  %v1959 = vshrl.u32 %v1958, 7
  %v1960 = vsub.s32 6, %v1959
  %v1961 = vrot.slane %v156, %v1960
  %v1962 = vmul.f32 %v1957, %v1961
  %1963 = vrot.lane.b32.xlu0 %v1920, 120
  %v1964 = vpop.permute.xlu0 %1963
  %v1965 = vlaneseq
  %v1966 = vshrl.u32 %v1965, 7
  %v1967 = vsub.s32 7, %v1966
  %v1968 = vrot.slane %v156, %v1967
  %v1969 = vmul.f32 %v1964, %v1968
  %1970 = vrot.lane.b32.xlu0 %v1920, 119
  %v1971 = vpop.permute.xlu0 %1970
  %v1972 = vlaneseq
  %v1973 = vshrl.u32 %v1972, 7
  %v1974 = vsub.s32 0, %v1973
  %v1975 = vrot.slane %v157, %v1974
  %v1976 = vmul.f32 %v1971, %v1975
  %v1977 = vpack.c.bf16 %v1934, %v1927
  %v1978 = vpack.c.bf16 %v1948, %v1941
  %v1979 = vpack.c.bf16 %v1955, %v1920
  %v1980 = vpack.c.bf16 %v1969, %v1962
  %v1981 = vpack.c.bf16 %v1608, %v1976
  %1983 = vset.pattern.permute.xlu0 0
  %1984 = vperm.xlu0 %1983, %v147
  %v1985 = vpop.permute.xlu0 %1984
  %vm1987 = vcmask 654336
  %v1989 = vsel %vm1987, %v146, 0
  %1991 = vmatprep.subr.bf16.mxu0 0
  %1992 = vmatpush1.bf16.msra.mxu0 %v1977
  %1993 = vmatprep.subr.bf16.mxu0 0
  %1994 = vmatpush1.bf16.msra.mxu0 %v1978
  %1995 = vmatprep.subr.bf16.mxu0 0
  %1996 = vmatpush1.bf16.msra.mxu0 %v1979
  %1997 = vmatprep.subr.bf16.mxu0 0
  %1998 = vmatpush1.bf16.msra.mxu0 %v1980
  %1999 = vmatprep.subr.bf16.mxu0 0
  %2000 = vmatpush1.bf16.msra.mxu0 %v1981
  %2001 = vmatprep.subr.bf16.mxu0 0
  %2002 = vmatpush1.bf16.msra.mxu0 0
  %2003 = vmatprep.subr.bf16.mxu0 0
  %2004 = vmatpush1.bf16.msra.mxu0 0
  %2005 = vmatprep.subr.bf16.mxu0 0
  %2006 = vmatpush1.bf16.msra.mxu0 0
  %2007 = vmatprep.subr.bf16.mxu0 0
  %2008 = vmatpush1.bf16.msra.mxu0 0
  %2009 = vmatprep.subr.bf16.mxu0 0
  %2010 = vmatpush1.bf16.msra.mxu0 0
  %2011 = vmatprep.subr.bf16.mxu0 0
  %2012 = vmatpush1.bf16.msra.mxu0 0
  %2013 = vmatprep.subr.bf16.mxu0 0
  %2014 = vmatpush1.bf16.msra.mxu0 0
  %2015 = vmatprep.subr.bf16.mxu0 0
  %2016 = vmatpush1.bf16.msra.mxu0 0
  %2017 = vmatprep.subr.bf16.mxu0 0
  %2018 = vmatpush1.bf16.msra.mxu0 0
  %2019 = vmatprep.subr.bf16.mxu0 0
  %2020 = vmatpush1.bf16.msra.mxu0 0
  %2021 = vmatprep.subr.bf16.mxu0 0
  %2022 = vmatpush1.bf16.msra.mxu0 0
  %2023 = vmatprep.mubr.bf16.mxu0 0
  %2024 = vmatmul.mubr.bf16.gmra.mrb[0].mxu0 %v1989
  %v2025 = vpop.f32.mrb[0].mxu0
  %v2026 = vadd.f32 %v1985, %v2025
  %v2027 = vpop.f32.mrb[0].mxu0
  %v2028 = vpop.f32.mrb[0].mxu0
  %v2029 = vpop.f32.mrb[0].mxu0
  %2030 = vdwg.mxu0
  %2031 = vst [vmem:[%s16] sm:$0xff] %v2026
  // Predicated region
  $region66: #{_lambda_.1} parent=0 // pred_check
    _
  $region67: #{_lambda_.1} parent=0 // pred_check_branch
    %2033 = sbr.rel (0) target = $region69
  $region68: #{_lambda_.1} parent=0 // pred_region
    _
  $region69: #{_lambda_.1} parent=0 // pred_fallthru
    _
  // Predicated region
  $region70: #{_lambda_.1} parent=0 // pred_check
    _
  $region71: #{_lambda_.1} parent=0 // pred_check_branch
    %2035 = sbr.rel (0) target = $region73
  $region72: #{_lambda_.1} parent=0 // pred_region
    _
  $region73: #{_lambda_.1} parent=0 // pred_fallthru
    _

</llo_original>
